<compile_context>
chip_gen: v6e
topology: v6e:2x2x1
jax: 0.10.0
libtpu: 0.0.40
codegen_flags: <defaults>
</compile_context>

<pallas_src>
import functools

import jax
import jax.numpy as jnp
from jax import lax
from jax.experimental import pallas as pl
from jax.experimental.pallas import tpu as pltpu


def _round_up(x, m):
    return (x + m - 1) // m * m


def _pick_batch_tile(batch, frames):
    """TB such that TB*frames ~ 128 MXU rows; TB is a multiple of 8 when the
    batch is actually tiled so the (TB, O_pad) output block obeys (8, 128)."""
    tb = max(1, min(batch, 128 // max(frames, 1)))
    if tb >= batch:
        return batch
    return max(8, (tb // 8) * 8)


def _make_kernel(TB, M, F, EF, G, C, NF, O_pad):
    """Build the NeXtVLAD kernel for a static config (all dims Python ints)."""
    assert EF == G * NF

    def kernel(x_ref, w_exp_ref, b_exp_ref, w_att_ref, b_att_ref,
               w_clu_ref, cw_ref, w_fc_ref, b_fc_ref, o_ref, flat_ref):
        # ---- fused linears on (TB*M, .) operands: bf16 in, f32 accumulate ----
        x = x_ref[...]                                                   # (TB*M, F) bf16

        expanded = jnp.dot(x, w_exp_ref[...],
                           preferred_element_type=jnp.float32) + b_exp_ref[...]   # (TBM, EF) f32
        expanded_bf = expanded.astype(jnp.bfloat16)

        att = jax.nn.sigmoid(
            jnp.dot(expanded_bf, w_att_ref[...],
                    preferred_element_type=jnp.float32) + b_att_ref[...])          # (TBM, G) f32

        scores = jnp.dot(expanded_bf, w_clu_ref[...],
                         preferred_element_type=jnp.float32)                        # (TBM, G*C) f32

        a_sum = jnp.zeros((TB, 1, C), jnp.float32)
        vlad = jnp.zeros((TB, NF, C), jnp.float32)

        # Group loop (G is small & static).  Each group does one batched MXU
        # contraction with batch=TB, K=M (K scaled up by the batch tiling).
        # TODO(synk): for large-G configs switch to lax.fori_loop(..., unroll=True)
        # to bound vreg live ranges.
        for g in range(G):
            s_g = scores[:, g * C:(g + 1) * C]                           # (TBM, C)
            s_g = s_g - jnp.max(s_g, axis=-1, keepdims=True)
            e_g = jnp.exp(s_g)
            # softmax denominator on the EUP (approx reciprocal) instead of a VALU divide
            p_g = e_g * pl.reciprocal(jnp.sum(e_g, axis=-1, keepdims=True),
                                      approx=True)
            act_g = p_g * att[:, g:g + 1]                                # (TBM, C) f32

            act3 = act_g.reshape(TB, M, C)                               # row split only
            feat3 = expanded_bf[:, g * NF:(g + 1) * NF].reshape(TB, M, NF)

            a_sum = a_sum + jnp.sum(act3, axis=1, keepdims=True)          # (TB, 1, C)
            # vlad[b, nf, c] += sum_m feat3[b, m, nf] * act3[b, m, c]
            vlad = vlad + lax.dot_general(
                feat3, act3.astype(jnp.bfloat16),
                dimension_numbers=(((1,), (1,)), ((0,), (0,))),
                preferred_element_type=jnp.float32)                       # (TB, NF, C)

        a = a_sum * cw_ref[...]                                          # (TB, NF, C)
        vlad = vlad - a

        # F.normalize(vlad - a, p=2, dim=1): L2 over NF per (batch, cluster).
        sumsq = jnp.sum(vlad * vlad, axis=1, keepdims=True)              # (TB, 1, C)
        vlad = vlad * lax.rsqrt(jnp.maximum(sumsq, 1e-24))               # == x / max(||x||, 1e-12)

        # TODO(synk): dropout is identity here (inference / eval mode).

        # Row-major flatten flat[b, nf*C + c] = vlad[b, nf, c] via a VMEM
        # scratch (avoids a lane-dim-changing vector reshape) so the final FC
        # is a single matmul with K = NF*C.
        for nf in range(NF):
            chunk = lax.slice_in_dim(vlad, nf, nf + 1, axis=1)           # (TB, 1, C)
            flat_ref[:, nf * C:(nf + 1) * C] = chunk.reshape(TB, C)
        flat = flat_ref[...].astype(jnp.bfloat16)                        # (TB, NF*C)

        out = jnp.dot(flat, w_fc_ref[...],
                      preferred_element_type=jnp.float32) + b_fc_ref[...]  # (TB, O_pad)
        o_ref[...] = out.astype(o_ref.dtype)                             # lane-dense store

    return kernel


def nextvlad_forward(x, params, *, expansion, groups, clusters, out_size):
    """Pallas NeXtVLAD forward. x: (B, M, F) float32 -> (B, out_size) float32."""
    B, M, F = x.shape
    E, G, C, O = expansion, groups, clusters, out_size
    EF = E * F
    NF = EF // G
    assert EF == G * NF

    w_exp, b_exp, w_att, b_att, w_clu, cw, w_fc, b_fc = params

    TB = _pick_batch_tile(B, M)
    B_pad = _round_up(B, TB)
    O_pad = _round_up(max(O, 128), 128)          # lane-dense output stores

    # --- plain-JAX glue outside the kernel: pad / cast / reshape ---
    xp = x
    if B_pad != B:
        xp = jnp.pad(xp, ((0, B_pad - B), (0, 0), (0, 0)))
    x2d = xp.reshape(B_pad * M, F).astype(jnp.bfloat16)

    w_exp_bf = w_exp.astype(jnp.bfloat16)
    w_att_bf = w_att.astype(jnp.bfloat16)
    w_clu_bf = w_clu.astype(jnp.bfloat16)
    w_fc_p = jnp.pad(w_fc, ((0, 0), (0, O_pad - O))).astype(jnp.bfloat16)
    b_fc_p = jnp.pad(b_fc, (0, O_pad - O)).reshape(1, O_pad).astype(jnp.float32)
    b_exp2 = b_exp.reshape(1, EF).astype(jnp.float32)
    b_att2 = b_att.reshape(1, G).astype(jnp.float32)
    cw_f32 = cw.astype(jnp.float32)

    kernel = _make_kernel(TB, M, F, EF, G, C, NF, O_pad)

    def full(shape):
        return pl.BlockSpec(shape, lambda i: (0,) * len(shape))

    # TODO(synk): for production sizes (large O/C) the resident FC weight can
    # exceed v7x's 64 MiB VMEM — tile O as a grid axis (w_fc BlockSpec
    # (NF*C, tO)) or stream it, and set vmem_limit_bytes explicitly.
    out = pl.pallas_call(
        kernel,
        out_shape=jax.ShapeDtypeStruct((B_pad, O_pad), jnp.float32),
        grid=(B_pad // TB,),
        in_specs=[
            pl.BlockSpec((TB * M, F), lambda i: (i, 0)),   # x: one batch tile / step
            full((F, EF)),                                  # expansion weight (bf16)
            full((1, EF)),                                  # expansion bias   (f32)
            full((EF, G)),                                  # attention weight (bf16)
            full((1, G)),                                   # attention bias   (f32)
            full((EF, G * C)),                              # cluster weight   (bf16)
            full((NF, C)),                                  # cluster_weight param (f32)
            full((NF * C, O_pad)),                          # FC weight, O padded (bf16)
            full((1, O_pad)),                               # FC bias, O padded (f32)
        ],
        out_specs=pl.BlockSpec((TB, O_pad), lambda i: (i, 0)),
        scratch_shapes=[pltpu.VMEM((TB, NF * C), jnp.float32)],
        compiler_params=pltpu.CompilerParams(
            dimension_semantics=("parallel",)),   # batch tiles are independent
    )(x2d, w_exp_bf, b_exp2, w_att_bf, b_att2, w_clu_bf, cw_f32, w_fc_p, b_fc_p)

    return out[:B, :O]


def nextvlad_reference(x, params, *, expansion, groups, clusters, out_size):
    """Plain-JAX f32 reference matching the PyTorch forward (eval mode)."""
    B, M, F = x.shape
    E, G, C, O = expansion, groups, clusters, out_size
    EF = E * F
    NF = EF // G
    w_exp, b_exp, w_att, b_att, w_clu, cw, w_fc_flat, b_fc = params

    inputs = x @ w_exp + b_exp                                  # (B, M, EF)
    att = jax.nn.sigmoid(inputs @ w_att + b_att)                # (B, M, G)
    att = att.reshape(B, M * G, 1)
    act = (inputs.reshape(B * M, EF) @ w_clu).reshape(B, M * G, C)
    act = jax.nn.softmax(act, axis=-1) * att                    # (B, M*G, C)
    a_sum = act.sum(axis=-2, keepdims=True)                     # (B, 1, C)
    a = a_sum * cw[None]                                        # (B, NF, C)
    vlad = jnp.einsum('bsc,bsn->bnc', act, inputs.reshape(B, M * G, NF))
    vlad = vlad - a
    norm = jnp.sqrt((vlad ** 2).sum(axis=1, keepdims=True))
    vlad = vlad / jnp.maximum(norm, 1e-12)
    flat = vlad.reshape(B, NF * C)
    return flat @ w_fc_flat + b_fc


def init_params(key, *, feature, expansion, groups, clusters, out_size):
    F, E, G, C, O = feature, expansion, groups, clusters, out_size
    EF = E * F
    NF = EF // G
    ks = jax.random.split(key, 8)
    w_exp = 0.05 * jax.random.normal(ks[0], (F, EF), jnp.float32)
    b_exp = 0.01 * jax.random.normal(ks[1], (EF,), jnp.float32)
    w_att = 0.05 * jax.random.normal(ks[2], (EF, G), jnp.float32)
    b_att = 0.01 * jax.random.normal(ks[3], (G,), jnp.float32)
    w_clu = 0.05 * jax.random.normal(ks[4], (EF, G * C), jnp.float32)
    cw = 0.01 * jax.random.normal(ks[5], (NF, C), jnp.float32)      # cluster_weight
    w_fc = 0.05 * jax.random.normal(ks[6], (NF * C, O), jnp.float32)
    b_fc = 0.01 * jax.random.normal(ks[7], (O,), jnp.float32)
    return (w_exp, b_exp, w_att, b_att, w_clu, cw, w_fc, b_fc)


if __name__ == "__main__":
    # Small config: FEATURE_SIZE=32, OUTPUT_SIZE=16, EXPANSION_SIZE=2,
    # CLUSTER_SIZE=8, NUM_GROUPS=4, DROPOUT_PROB ignored at eval.
    B, M, F = 2, 8, 32
    E, G, C, O = 2, 4, 8, 16

    key = jax.random.PRNGKey(0)
    kx, kp = jax.random.split(key)
    x = jax.random.normal(kx, (B, M, F), jnp.float32)
    params = init_params(kp, feature=F, expansion=E, groups=G, clusters=C, out_size=O)

    run = functools.partial(nextvlad_forward, expansion=E, groups=G,
                            clusters=C, out_size=O)
    ref = functools.partial(nextvlad_reference, expansion=E, groups=G,
                            clusters=C, out_size=O)

    out = jax.block_until_ready(run(x, params))
    expected = jax.block_until_ready(ref(x, params))

    assert out.shape == (B, O), out.shape
    assert bool(jnp.all(jnp.isfinite(out)))
    # bf16 matmul operands + approx reciprocal -> slightly looser tolerance vs f32 ref.
    assert bool(jnp.allclose(out, expected, rtol=2e-2, atol=2e-2)), (
        "mismatch vs reference: max abs err "
        f"{float(jnp.max(jnp.abs(out - expected)))}")

    print("KERNEL_OK")
</pallas_src>

<mosaic_0001>
module attributes {stable_mosaic.version = 11 : i64} {
  func.func @kernel(%arg0: i32, %arg1: memref<16x32xbf16, #tpu.memory_space<vmem>>, %arg2: memref<32x64xbf16, #tpu.memory_space<vmem>>, %arg3: memref<1x64xf32, #tpu.memory_space<vmem>>, %arg4: memref<64x4xbf16, #tpu.memory_space<vmem>>, %arg5: memref<1x4xf32, #tpu.memory_space<vmem>>, %arg6: memref<64x32xbf16, #tpu.memory_space<vmem>>, %arg7: memref<16x8xf32, #tpu.memory_space<vmem>>, %arg8: memref<128x128xbf16, #tpu.memory_space<vmem>>, %arg9: memref<1x128xf32, #tpu.memory_space<vmem>>, %arg10: memref<2x128xf32, #tpu.memory_space<vmem>>, %arg11: memref<2x128xf32, #tpu.memory_space<vmem>>) attributes {dimension_semantics = [#tpu.dimension_semantics<parallel>], iteration_bounds = array<i64: 1>, scalar_prefetch = 0 : i64, scratch_operands = 1 : i64, tpu.core_type = #tpu.core_type<tc>, window_params = [{transform_indices = @transform_0, window_bounds = array<i64: 16, 32>}, {pipeline_mode = #tpu.pipeline_mode<synchronous>, transform_indices = @transform_1, window_bounds = array<i64: 32, 64>}, {pipeline_mode = #tpu.pipeline_mode<synchronous>, transform_indices = @transform_2, window_bounds = array<i64: 1, 64>}, {pipeline_mode = #tpu.pipeline_mode<synchronous>, transform_indices = @transform_3, window_bounds = array<i64: 64, 4>}, {pipeline_mode = #tpu.pipeline_mode<synchronous>, transform_indices = @transform_4, window_bounds = array<i64: 1, 4>}, {pipeline_mode = #tpu.pipeline_mode<synchronous>, transform_indices = @transform_5, window_bounds = array<i64: 64, 32>}, {pipeline_mode = #tpu.pipeline_mode<synchronous>, transform_indices = @transform_6, window_bounds = array<i64: 16, 8>}, {pipeline_mode = #tpu.pipeline_mode<synchronous>, transform_indices = @transform_7, window_bounds = array<i64: 128, 128>}, {pipeline_mode = #tpu.pipeline_mode<synchronous>, transform_indices = @transform_8, window_bounds = array<i64: 1, 128>}, {transform_indices = @transform_9, window_bounds = array<i64: 2, 128>}]} {
    %c0 = arith.constant 0 : index
    %c0_0 = arith.constant 0 : index
    %0 = vector.load %arg1[%c0, %c0_0] : memref<16x32xbf16, #tpu.memory_space<vmem>>, vector<16x32xbf16>
    %c0_1 = arith.constant 0 : index
    %c0_2 = arith.constant 0 : index
    %1 = vector.load %arg2[%c0_1, %c0_2] : memref<32x64xbf16, #tpu.memory_space<vmem>>, vector<32x64xbf16>
    %cst = arith.constant dense<0.000000e+00> : vector<16x64xf32>
    %2 = tpu.matmul %0, %1, %cst {dimension_numbers = #tpu.dot_dimension_numbers<[1], [0], [0], [1], [0, 0, 1, 1], [], []>} : vector<16x32xbf16>, vector<32x64xbf16>, vector<16x64xf32> -> vector<16x64xf32>
    %c0_3 = arith.constant 0 : index
    %c0_4 = arith.constant 0 : index
    %3 = vector.load %arg3[%c0_3, %c0_4] : memref<1x64xf32, #tpu.memory_space<vmem>>, vector<1x64xf32>
    %4 = vector.broadcast %3 : vector<1x64xf32> to vector<16x64xf32>
    %5 = arith.addf %2, %4 : vector<16x64xf32>
    %6 = arith.truncf %5 : vector<16x64xf32> to vector<16x64xbf16>
    %c0_5 = arith.constant 0 : index
    %c0_6 = arith.constant 0 : index
    %7 = vector.load %arg4[%c0_5, %c0_6] : memref<64x4xbf16, #tpu.memory_space<vmem>>, vector<64x4xbf16>
    %cst_7 = arith.constant dense<0.000000e+00> : vector<16x4xf32>
    %8 = tpu.matmul %6, %7, %cst_7 {dimension_numbers = #tpu.dot_dimension_numbers<[1], [0], [0], [1], [0, 0, 1, 1], [], []>} : vector<16x64xbf16>, vector<64x4xbf16>, vector<16x4xf32> -> vector<16x4xf32>
    %c0_8 = arith.constant 0 : index
    %c0_9 = arith.constant 0 : index
    %9 = vector.load %arg5[%c0_8, %c0_9] : memref<1x4xf32, #tpu.memory_space<vmem>>, vector<1x4xf32>
    %10 = vector.broadcast %9 : vector<1x4xf32> to vector<16x4xf32>
    %11 = arith.addf %8, %10 : vector<16x4xf32>
    %12 = arith.negf %11 : vector<16x4xf32>
    %13 = math.exp %12 : vector<16x4xf32>
    %cst_10 = arith.constant 1.000000e+00 : f32
    %14 = vector.broadcast %cst_10 : f32 to vector<16x4xf32>
    %15 = arith.addf %14, %13 : vector<16x4xf32>
    %16 = arith.divf %14, %15 : vector<16x4xf32>
    %c0_11 = arith.constant 0 : index
    %c0_12 = arith.constant 0 : index
    %17 = vector.load %arg6[%c0_11, %c0_12] : memref<64x32xbf16, #tpu.memory_space<vmem>>, vector<64x32xbf16>
    %cst_13 = arith.constant dense<0.000000e+00> : vector<16x32xf32>
    %18 = tpu.matmul %6, %17, %cst_13 {dimension_numbers = #tpu.dot_dimension_numbers<[1], [0], [0], [1], [0, 0, 1, 1], [], []>} : vector<16x64xbf16>, vector<64x32xbf16>, vector<16x32xf32> -> vector<16x32xf32>
    %cst_14 = arith.constant 0.000000e+00 : f32
    %19 = vector.broadcast %cst_14 : f32 to vector<2x1x8xf32>
    %cst_15 = arith.constant 0.000000e+00 : f32
    %20 = vector.broadcast %cst_15 : f32 to vector<2x16x8xf32>
    %21 = vector.extract_strided_slice %18 {offsets = [0, 0], sizes = [16, 8], strides = [1, 1]} : vector<16x32xf32> to vector<16x8xf32>
    %cst_16 = arith.constant dense<0xFF800000> : vector<16xf32>
    %22 = vector.multi_reduction <maximumf>, %21, %cst_16 [1] : vector<16x8xf32> to vector<16xf32>
    %23 = vector.shape_cast %22 : vector<16xf32> to vector<16x1xf32>
    %24 = vector.broadcast %23 : vector<16x1xf32> to vector<16x8xf32>
    %25 = arith.subf %21, %24 : vector<16x8xf32>
    %26 = math.exp %25 : vector<16x8xf32>
    %cst_17 = arith.constant dense<0.000000e+00> : vector<16xf32>
    %27 = vector.multi_reduction <add>, %26, %cst_17 [1] : vector<16x8xf32> to vector<16xf32>
    %28 = vector.shape_cast %27 : vector<16xf32> to vector<16x1xf32>
    %29 = tpu.reciprocal %28 {approx = true} : vector<16x1xf32> -> vector<16x1xf32>
    %30 = vector.broadcast %29 : vector<16x1xf32> to vector<16x8xf32>
    %31 = arith.mulf %26, %30 : vector<16x8xf32>
    %32 = vector.extract_strided_slice %16 {offsets = [0, 0], sizes = [16, 1], strides = [1, 1]} : vector<16x4xf32> to vector<16x1xf32>
    %33 = vector.broadcast %32 : vector<16x1xf32> to vector<16x8xf32>
    %34 = arith.mulf %31, %33 : vector<16x8xf32>
    %35 = vector.shape_cast %34 : vector<16x8xf32> to vector<2x8x8xf32>
    %36 = vector.extract_strided_slice %6 {offsets = [0, 0], sizes = [16, 16], strides = [1, 1]} : vector<16x64xbf16> to vector<16x16xbf16>
    %37 = vector.shape_cast %36 : vector<16x16xbf16> to vector<2x8x16xbf16>
    %cst_18 = arith.constant dense<0.000000e+00> : vector<2x8xf32>
    %38 = vector.multi_reduction <add>, %35, %cst_18 [1] : vector<2x8x8xf32> to vector<2x8xf32>
    %39 = vector.shape_cast %38 : vector<2x8xf32> to vector<2x1x8xf32>
    %40 = arith.addf %19, %39 : vector<2x1x8xf32>
    %41 = arith.truncf %35 : vector<2x8x8xf32> to vector<2x8x8xbf16>
    %cst_19 = arith.constant dense<0.000000e+00> : vector<2x16x8xf32>
    %42 = tpu.matmul %37, %41, %cst_19 {dimension_numbers = #tpu.dot_dimension_numbers<[1], [1], [2], [2], [0, 0, 0, 2, 1, 2], [0], [0]>} : vector<2x8x16xbf16>, vector<2x8x8xbf16>, vector<2x16x8xf32> -> vector<2x16x8xf32>
    %43 = arith.addf %20, %42 : vector<2x16x8xf32>
    %44 = vector.extract_strided_slice %18 {offsets = [0, 8], sizes = [16, 8], strides = [1, 1]} : vector<16x32xf32> to vector<16x8xf32>
    %cst_20 = arith.constant dense<0xFF800000> : vector<16xf32>
    %45 = vector.multi_reduction <maximumf>, %44, %cst_20 [1] : vector<16x8xf32> to vector<16xf32>
    %46 = vector.shape_cast %45 : vector<16xf32> to vector<16x1xf32>
    %47 = vector.broadcast %46 : vector<16x1xf32> to vector<16x8xf32>
    %48 = arith.subf %44, %47 : vector<16x8xf32>
    %49 = math.exp %48 : vector<16x8xf32>
    %cst_21 = arith.constant dense<0.000000e+00> : vector<16xf32>
    %50 = vector.multi_reduction <add>, %49, %cst_21 [1] : vector<16x8xf32> to vector<16xf32>
    %51 = vector.shape_cast %50 : vector<16xf32> to vector<16x1xf32>
    %52 = tpu.reciprocal %51 {approx = true} : vector<16x1xf32> -> vector<16x1xf32>
    %53 = vector.broadcast %52 : vector<16x1xf32> to vector<16x8xf32>
    %54 = arith.mulf %49, %53 : vector<16x8xf32>
    %55 = vector.extract_strided_slice %16 {offsets = [0, 1], sizes = [16, 1], strides = [1, 1]} : vector<16x4xf32> to vector<16x1xf32>
    %56 = vector.broadcast %55 : vector<16x1xf32> to vector<16x8xf32>
    %57 = arith.mulf %54, %56 : vector<16x8xf32>
    %58 = vector.shape_cast %57 : vector<16x8xf32> to vector<2x8x8xf32>
    %59 = vector.extract_strided_slice %6 {offsets = [0, 16], sizes = [16, 16], strides = [1, 1]} : vector<16x64xbf16> to vector<16x16xbf16>
    %60 = vector.shape_cast %59 : vector<16x16xbf16> to vector<2x8x16xbf16>
    %cst_22 = arith.constant dense<0.000000e+00> : vector<2x8xf32>
    %61 = vector.multi_reduction <add>, %58, %cst_22 [1] : vector<2x8x8xf32> to vector<2x8xf32>
    %62 = vector.shape_cast %61 : vector<2x8xf32> to vector<2x1x8xf32>
    %63 = arith.addf %40, %62 : vector<2x1x8xf32>
    %64 = arith.truncf %58 : vector<2x8x8xf32> to vector<2x8x8xbf16>
    %cst_23 = arith.constant dense<0.000000e+00> : vector<2x16x8xf32>
    %65 = tpu.matmul %60, %64, %cst_23 {dimension_numbers = #tpu.dot_dimension_numbers<[1], [1], [2], [2], [0, 0, 0, 2, 1, 2], [0], [0]>} : vector<2x8x16xbf16>, vector<2x8x8xbf16>, vector<2x16x8xf32> -> vector<2x16x8xf32>
    %66 = arith.addf %43, %65 : vector<2x16x8xf32>
    %67 = vector.extract_strided_slice %18 {offsets = [0, 16], sizes = [16, 8], strides = [1, 1]} : vector<16x32xf32> to vector<16x8xf32>
    %cst_24 = arith.constant dense<0xFF800000> : vector<16xf32>
    %68 = vector.multi_reduction <maximumf>, %67, %cst_24 [1] : vector<16x8xf32> to vector<16xf32>
    %69 = vector.shape_cast %68 : vector<16xf32> to vector<16x1xf32>
    %70 = vector.broadcast %69 : vector<16x1xf32> to vector<16x8xf32>
    %71 = arith.subf %67, %70 : vector<16x8xf32>
    %72 = math.exp %71 : vector<16x8xf32>
    %cst_25 = arith.constant dense<0.000000e+00> : vector<16xf32>
    %73 = vector.multi_reduction <add>, %72, %cst_25 [1] : vector<16x8xf32> to vector<16xf32>
    %74 = vector.shape_cast %73 : vector<16xf32> to vector<16x1xf32>
    %75 = tpu.reciprocal %74 {approx = true} : vector<16x1xf32> -> vector<16x1xf32>
    %76 = vector.broadcast %75 : vector<16x1xf32> to vector<16x8xf32>
    %77 = arith.mulf %72, %76 : vector<16x8xf32>
    %78 = vector.extract_strided_slice %16 {offsets = [0, 2], sizes = [16, 1], strides = [1, 1]} : vector<16x4xf32> to vector<16x1xf32>
    %79 = vector.broadcast %78 : vector<16x1xf32> to vector<16x8xf32>
    %80 = arith.mulf %77, %79 : vector<16x8xf32>
    %81 = vector.shape_cast %80 : vector<16x8xf32> to vector<2x8x8xf32>
    %82 = vector.extract_strided_slice %6 {offsets = [0, 32], sizes = [16, 16], strides = [1, 1]} : vector<16x64xbf16> to vector<16x16xbf16>
    %83 = vector.shape_cast %82 : vector<16x16xbf16> to vector<2x8x16xbf16>
    %cst_26 = arith.constant dense<0.000000e+00> : vector<2x8xf32>
    %84 = vector.multi_reduction <add>, %81, %cst_26 [1] : vector<2x8x8xf32> to vector<2x8xf32>
    %85 = vector.shape_cast %84 : vector<2x8xf32> to vector<2x1x8xf32>
    %86 = arith.addf %63, %85 : vector<2x1x8xf32>
    %87 = arith.truncf %81 : vector<2x8x8xf32> to vector<2x8x8xbf16>
    %cst_27 = arith.constant dense<0.000000e+00> : vector<2x16x8xf32>
    %88 = tpu.matmul %83, %87, %cst_27 {dimension_numbers = #tpu.dot_dimension_numbers<[1], [1], [2], [2], [0, 0, 0, 2, 1, 2], [0], [0]>} : vector<2x8x16xbf16>, vector<2x8x8xbf16>, vector<2x16x8xf32> -> vector<2x16x8xf32>
    %89 = arith.addf %66, %88 : vector<2x16x8xf32>
    %90 = vector.extract_strided_slice %18 {offsets = [0, 24], sizes = [16, 8], strides = [1, 1]} : vector<16x32xf32> to vector<16x8xf32>
    %cst_28 = arith.constant dense<0xFF800000> : vector<16xf32>
    %91 = vector.multi_reduction <maximumf>, %90, %cst_28 [1] : vector<16x8xf32> to vector<16xf32>
    %92 = vector.shape_cast %91 : vector<16xf32> to vector<16x1xf32>
    %93 = vector.broadcast %92 : vector<16x1xf32> to vector<16x8xf32>
    %94 = arith.subf %90, %93 : vector<16x8xf32>
    %95 = math.exp %94 : vector<16x8xf32>
    %cst_29 = arith.constant dense<0.000000e+00> : vector<16xf32>
    %96 = vector.multi_reduction <add>, %95, %cst_29 [1] : vector<16x8xf32> to vector<16xf32>
    %97 = vector.shape_cast %96 : vector<16xf32> to vector<16x1xf32>
    %98 = tpu.reciprocal %97 {approx = true} : vector<16x1xf32> -> vector<16x1xf32>
    %99 = vector.broadcast %98 : vector<16x1xf32> to vector<16x8xf32>
    %100 = arith.mulf %95, %99 : vector<16x8xf32>
    %101 = vector.extract_strided_slice %16 {offsets = [0, 3], sizes = [16, 1], strides = [1, 1]} : vector<16x4xf32> to vector<16x1xf32>
    %102 = vector.broadcast %101 : vector<16x1xf32> to vector<16x8xf32>
    %103 = arith.mulf %100, %102 : vector<16x8xf32>
    %104 = vector.shape_cast %103 : vector<16x8xf32> to vector<2x8x8xf32>
    %105 = vector.extract_strided_slice %6 {offsets = [0, 48], sizes = [16, 16], strides = [1, 1]} : vector<16x64xbf16> to vector<16x16xbf16>
    %106 = vector.shape_cast %105 : vector<16x16xbf16> to vector<2x8x16xbf16>
    %cst_30 = arith.constant dense<0.000000e+00> : vector<2x8xf32>
    %107 = vector.multi_reduction <add>, %104, %cst_30 [1] : vector<2x8x8xf32> to vector<2x8xf32>
    %108 = vector.shape_cast %107 : vector<2x8xf32> to vector<2x1x8xf32>
    %109 = arith.addf %86, %108 : vector<2x1x8xf32>
    %110 = arith.truncf %104 : vector<2x8x8xf32> to vector<2x8x8xbf16>
    %cst_31 = arith.constant dense<0.000000e+00> : vector<2x16x8xf32>
    %111 = tpu.matmul %106, %110, %cst_31 {dimension_numbers = #tpu.dot_dimension_numbers<[1], [1], [2], [2], [0, 0, 0, 2, 1, 2], [0], [0]>} : vector<2x8x16xbf16>, vector<2x8x8xbf16>, vector<2x16x8xf32> -> vector<2x16x8xf32>
    %112 = arith.addf %89, %111 : vector<2x16x8xf32>
    %c0_32 = arith.constant 0 : index
    %c0_33 = arith.constant 0 : index
    %113 = vector.load %arg7[%c0_32, %c0_33] : memref<16x8xf32, #tpu.memory_space<vmem>>, vector<16x8xf32>
    %114 = vector.shape_cast %113 : vector<16x8xf32> to vector<1x16x8xf32>
    %115 = vector.broadcast %109 : vector<2x1x8xf32> to vector<2x16x8xf32>
    %116 = vector.broadcast %114 : vector<1x16x8xf32> to vector<2x16x8xf32>
    %117 = arith.mulf %115, %116 : vector<2x16x8xf32>
    %118 = arith.subf %112, %117 : vector<2x16x8xf32>
    %119 = arith.mulf %118, %118 : vector<2x16x8xf32>
    %cst_34 = arith.constant dense<0.000000e+00> : vector<2x8xf32>
    %120 = vector.multi_reduction <add>, %119, %cst_34 [1] : vector<2x16x8xf32> to vector<2x8xf32>
    %121 = vector.shape_cast %120 : vector<2x8xf32> to vector<2x1x8xf32>
    %cst_35 = arith.constant 1.000000e-24 : f32
    %122 = vector.broadcast %cst_35 : f32 to vector<2x1x8xf32>
    %123 = arith.maximumf %121, %122 : vector<2x1x8xf32>
    %124 = math.rsqrt %123 : vector<2x1x8xf32>
    %125 = vector.broadcast %124 : vector<2x1x8xf32> to vector<2x16x8xf32>
    %126 = arith.mulf %118, %125 : vector<2x16x8xf32>
    %127 = vector.extract_strided_slice %126 {offsets = [0, 0, 0], sizes = [2, 1, 8], strides = [1, 1, 1]} : vector<2x16x8xf32> to vector<2x1x8xf32>
    %128 = vector.shape_cast %127 : vector<2x1x8xf32> to vector<2x8xf32>
    %c0_36 = arith.constant 0 : index
    %c0_37 = arith.constant 0 : index
    %129 = vector.load %arg11[%c0_36, %c0_37] : memref<2x128xf32, #tpu.memory_space<vmem>>, vector<2x8xf32>
    tpu.vector_store %arg11[%c0_36, %c0_37], %128 {strides = array<i32>} : memref<2x128xf32, #tpu.memory_space<vmem>>, vector<2x8xf32>,
    %130 = vector.extract_strided_slice %126 {offsets = [0, 1, 0], sizes = [2, 1, 8], strides = [1, 1, 1]} : vector<2x16x8xf32> to vector<2x1x8xf32>
    %131 = vector.shape_cast %130 : vector<2x1x8xf32> to vector<2x8xf32>
    %c0_38 = arith.constant 0 : index
    %c8 = arith.constant 8 : index
    %132 = vector.load %arg11[%c0_38, %c8] : memref<2x128xf32, #tpu.memory_space<vmem>>, vector<2x8xf32>
    tpu.vector_store %arg11[%c0_38, %c8], %131 {strides = array<i32>} : memref<2x128xf32, #tpu.memory_space<vmem>>, vector<2x8xf32>,
    %133 = vector.extract_strided_slice %126 {offsets = [0, 2, 0], sizes = [2, 1, 8], strides = [1, 1, 1]} : vector<2x16x8xf32> to vector<2x1x8xf32>
    %134 = vector.shape_cast %133 : vector<2x1x8xf32> to vector<2x8xf32>
    %c0_39 = arith.constant 0 : index
    %c16 = arith.constant 16 : index
    %135 = vector.load %arg11[%c0_39, %c16] : memref<2x128xf32, #tpu.memory_space<vmem>>, vector<2x8xf32>
    tpu.vector_store %arg11[%c0_39, %c16], %134 {strides = array<i32>} : memref<2x128xf32, #tpu.memory_space<vmem>>, vector<2x8xf32>,
    %136 = vector.extract_strided_slice %126 {offsets = [0, 3, 0], sizes = [2, 1, 8], strides = [1, 1, 1]} : vector<2x16x8xf32> to vector<2x1x8xf32>
    %137 = vector.shape_cast %136 : vector<2x1x8xf32> to vector<2x8xf32>
    %c0_40 = arith.constant 0 : index
    %c24 = arith.constant 24 : index
    %138 = vector.load %arg11[%c0_40, %c24] : memref<2x128xf32, #tpu.memory_space<vmem>>, vector<2x8xf32>
    tpu.vector_store %arg11[%c0_40, %c24], %137 {strides = array<i32>} : memref<2x128xf32, #tpu.memory_space<vmem>>, vector<2x8xf32>,
    %139 = vector.extract_strided_slice %126 {offsets = [0, 4, 0], sizes = [2, 1, 8], strides = [1, 1, 1]} : vector<2x16x8xf32> to vector<2x1x8xf32>
    %140 = vector.shape_cast %139 : vector<2x1x8xf32> to vector<2x8xf32>
    %c0_41 = arith.constant 0 : index
    %c32 = arith.constant 32 : index
    %141 = vector.load %arg11[%c0_41, %c32] : memref<2x128xf32, #tpu.memory_space<vmem>>, vector<2x8xf32>
    tpu.vector_store %arg11[%c0_41, %c32], %140 {strides = array<i32>} : memref<2x128xf32, #tpu.memory_space<vmem>>, vector<2x8xf32>,
    %142 = vector.extract_strided_slice %126 {offsets = [0, 5, 0], sizes = [2, 1, 8], strides = [1, 1, 1]} : vector<2x16x8xf32> to vector<2x1x8xf32>
    %143 = vector.shape_cast %142 : vector<2x1x8xf32> to vector<2x8xf32>
    %c0_42 = arith.constant 0 : index
    %c40 = arith.constant 40 : index
    %144 = vector.load %arg11[%c0_42, %c40] : memref<2x128xf32, #tpu.memory_space<vmem>>, vector<2x8xf32>
    tpu.vector_store %arg11[%c0_42, %c40], %143 {strides = array<i32>} : memref<2x128xf32, #tpu.memory_space<vmem>>, vector<2x8xf32>,
    %145 = vector.extract_strided_slice %126 {offsets = [0, 6, 0], sizes = [2, 1, 8], strides = [1, 1, 1]} : vector<2x16x8xf32> to vector<2x1x8xf32>
    %146 = vector.shape_cast %145 : vector<2x1x8xf32> to vector<2x8xf32>
    %c0_43 = arith.constant 0 : index
    %c48 = arith.constant 48 : index
    %147 = vector.load %arg11[%c0_43, %c48] : memref<2x128xf32, #tpu.memory_space<vmem>>, vector<2x8xf32>
    tpu.vector_store %arg11[%c0_43, %c48], %146 {strides = array<i32>} : memref<2x128xf32, #tpu.memory_space<vmem>>, vector<2x8xf32>,
    %148 = vector.extract_strided_slice %126 {offsets = [0, 7, 0], sizes = [2, 1, 8], strides = [1, 1, 1]} : vector<2x16x8xf32> to vector<2x1x8xf32>
    %149 = vector.shape_cast %148 : vector<2x1x8xf32> to vector<2x8xf32>
    %c0_44 = arith.constant 0 : index
    %c56 = arith.constant 56 : index
    %150 = vector.load %arg11[%c0_44, %c56] : memref<2x128xf32, #tpu.memory_space<vmem>>, vector<2x8xf32>
    tpu.vector_store %arg11[%c0_44, %c56], %149 {strides = array<i32>} : memref<2x128xf32, #tpu.memory_space<vmem>>, vector<2x8xf32>,
    %151 = vector.extract_strided_slice %126 {offsets = [0, 8, 0], sizes = [2, 1, 8], strides = [1, 1, 1]} : vector<2x16x8xf32> to vector<2x1x8xf32>
    %152 = vector.shape_cast %151 : vector<2x1x8xf32> to vector<2x8xf32>
    %c0_45 = arith.constant 0 : index
    %c64 = arith.constant 64 : index
    %153 = vector.load %arg11[%c0_45, %c64] : memref<2x128xf32, #tpu.memory_space<vmem>>, vector<2x8xf32>
    tpu.vector_store %arg11[%c0_45, %c64], %152 {strides = array<i32>} : memref<2x128xf32, #tpu.memory_space<vmem>>, vector<2x8xf32>,
    %154 = vector.extract_strided_slice %126 {offsets = [0, 9, 0], sizes = [2, 1, 8], strides = [1, 1, 1]} : vector<2x16x8xf32> to vector<2x1x8xf32>
    %155 = vector.shape_cast %154 : vector<2x1x8xf32> to vector<2x8xf32>
    %c0_46 = arith.constant 0 : index
    %c72 = arith.constant 72 : index
    %156 = vector.load %arg11[%c0_46, %c72] : memref<2x128xf32, #tpu.memory_space<vmem>>, vector<2x8xf32>
    tpu.vector_store %arg11[%c0_46, %c72], %155 {strides = array<i32>} : memref<2x128xf32, #tpu.memory_space<vmem>>, vector<2x8xf32>,
    %157 = vector.extract_strided_slice %126 {offsets = [0, 10, 0], sizes = [2, 1, 8], strides = [1, 1, 1]} : vector<2x16x8xf32> to vector<2x1x8xf32>
    %158 = vector.shape_cast %157 : vector<2x1x8xf32> to vector<2x8xf32>
    %c0_47 = arith.constant 0 : index
    %c80 = arith.constant 80 : index
    %159 = vector.load %arg11[%c0_47, %c80] : memref<2x128xf32, #tpu.memory_space<vmem>>, vector<2x8xf32>
    tpu.vector_store %arg11[%c0_47, %c80], %158 {strides = array<i32>} : memref<2x128xf32, #tpu.memory_space<vmem>>, vector<2x8xf32>,
    %160 = vector.extract_strided_slice %126 {offsets = [0, 11, 0], sizes = [2, 1, 8], strides = [1, 1, 1]} : vector<2x16x8xf32> to vector<2x1x8xf32>
    %161 = vector.shape_cast %160 : vector<2x1x8xf32> to vector<2x8xf32>
    %c0_48 = arith.constant 0 : index
    %c88 = arith.constant 88 : index
    %162 = vector.load %arg11[%c0_48, %c88] : memref<2x128xf32, #tpu.memory_space<vmem>>, vector<2x8xf32>
    tpu.vector_store %arg11[%c0_48, %c88], %161 {strides = array<i32>} : memref<2x128xf32, #tpu.memory_space<vmem>>, vector<2x8xf32>,
    %163 = vector.extract_strided_slice %126 {offsets = [0, 12, 0], sizes = [2, 1, 8], strides = [1, 1, 1]} : vector<2x16x8xf32> to vector<2x1x8xf32>
    %164 = vector.shape_cast %163 : vector<2x1x8xf32> to vector<2x8xf32>
    %c0_49 = arith.constant 0 : index
    %c96 = arith.constant 96 : index
    %165 = vector.load %arg11[%c0_49, %c96] : memref<2x128xf32, #tpu.memory_space<vmem>>, vector<2x8xf32>
    tpu.vector_store %arg11[%c0_49, %c96], %164 {strides = array<i32>} : memref<2x128xf32, #tpu.memory_space<vmem>>, vector<2x8xf32>,
    %166 = vector.extract_strided_slice %126 {offsets = [0, 13, 0], sizes = [2, 1, 8], strides = [1, 1, 1]} : vector<2x16x8xf32> to vector<2x1x8xf32>
    %167 = vector.shape_cast %166 : vector<2x1x8xf32> to vector<2x8xf32>
    %c0_50 = arith.constant 0 : index
    %c104 = arith.constant 104 : index
    %168 = vector.load %arg11[%c0_50, %c104] : memref<2x128xf32, #tpu.memory_space<vmem>>, vector<2x8xf32>
    tpu.vector_store %arg11[%c0_50, %c104], %167 {strides = array<i32>} : memref<2x128xf32, #tpu.memory_space<vmem>>, vector<2x8xf32>,
    %169 = vector.extract_strided_slice %126 {offsets = [0, 14, 0], sizes = [2, 1, 8], strides = [1, 1, 1]} : vector<2x16x8xf32> to vector<2x1x8xf32>
    %170 = vector.shape_cast %169 : vector<2x1x8xf32> to vector<2x8xf32>
    %c0_51 = arith.constant 0 : index
    %c112 = arith.constant 112 : index
    %171 = vector.load %arg11[%c0_51, %c112] : memref<2x128xf32, #tpu.memory_space<vmem>>, vector<2x8xf32>
    tpu.vector_store %arg11[%c0_51, %c112], %170 {strides = array<i32>} : memref<2x128xf32, #tpu.memory_space<vmem>>, vector<2x8xf32>,
    %172 = vector.extract_strided_slice %126 {offsets = [0, 15, 0], sizes = [2, 1, 8], strides = [1, 1, 1]} : vector<2x16x8xf32> to vector<2x1x8xf32>
    %173 = vector.shape_cast %172 : vector<2x1x8xf32> to vector<2x8xf32>
    %c0_52 = arith.constant 0 : index
    %c120 = arith.constant 120 : index
    %174 = vector.load %arg11[%c0_52, %c120] : memref<2x128xf32, #tpu.memory_space<vmem>>, vector<2x8xf32>
    tpu.vector_store %arg11[%c0_52, %c120], %173 {strides = array<i32>} : memref<2x128xf32, #tpu.memory_space<vmem>>, vector<2x8xf32>,
    %c0_53 = arith.constant 0 : index
    %c0_54 = arith.constant 0 : index
    %175 = vector.load %arg11[%c0_53, %c0_54] : memref<2x128xf32, #tpu.memory_space<vmem>>, vector<2x128xf32>
    %176 = arith.truncf %175 : vector<2x128xf32> to vector<2x128xbf16>
    %c0_55 = arith.constant 0 : index
    %c0_56 = arith.constant 0 : index
    %177 = vector.load %arg8[%c0_55, %c0_56] : memref<128x128xbf16, #tpu.memory_space<vmem>>, vector<128x128xbf16>
    %cst_57 = arith.constant dense<0.000000e+00> : vector<2x128xf32>
    %178 = tpu.matmul %176, %177, %cst_57 {dimension_numbers = #tpu.dot_dimension_numbers<[1], [0], [0], [1], [0, 0, 1, 1], [], []>} : vector<2x128xbf16>, vector<128x128xbf16>, vector<2x128xf32> -> vector<2x128xf32>
    %c0_58 = arith.constant 0 : index
    %c0_59 = arith.constant 0 : index
    %179 = vector.load %arg9[%c0_58, %c0_59] : memref<1x128xf32, #tpu.memory_space<vmem>>, vector<1x128xf32>
    %180 = vector.broadcast %179 : vector<1x128xf32> to vector<2x128xf32>
    %181 = arith.addf %178, %180 : vector<2x128xf32>
    %c0_60 = arith.constant 0 : index
    %c0_61 = arith.constant 0 : index
    %182 = vector.load %arg10[%c0_60, %c0_61] : memref<2x128xf32, #tpu.memory_space<vmem>>, vector<2x128xf32>
    tpu.vector_store %arg10[%c0_60, %c0_61], %181 {strides = array<i32>} : memref<2x128xf32, #tpu.memory_space<vmem>>, vector<2x128xf32>,
    return
  }
  func.func @transform_0(%arg0: i32) -> (i32, i32) {
    %c0_i32 = arith.constant 0 : i32
    %c0_i32_0 = arith.constant 0 : i32
    return %arg0, %c0_i32 : i32, i32
  }
  func.func @transform_1(%arg0: i32) -> (i32, i32) {
    %c0_i32 = arith.constant 0 : i32
    %c0_i32_0 = arith.constant 0 : i32
    %c0_i32_1 = arith.constant 0 : i32
    return %c0_i32, %c0_i32_0 : i32, i32
  }
  func.func @transform_2(%arg0: i32) -> (i32, i32) {
    %c0_i32 = arith.constant 0 : i32
    %c0_i32_0 = arith.constant 0 : i32
    %c0_i32_1 = arith.constant 0 : i32
    return %c0_i32, %c0_i32_0 : i32, i32
  }
  func.func @transform_3(%arg0: i32) -> (i32, i32) {
    %c0_i32 = arith.constant 0 : i32
    %c0_i32_0 = arith.constant 0 : i32
    %c0_i32_1 = arith.constant 0 : i32
    return %c0_i32, %c0_i32_0 : i32, i32
  }
  func.func @transform_4(%arg0: i32) -> (i32, i32) {
    %c0_i32 = arith.constant 0 : i32
    %c0_i32_0 = arith.constant 0 : i32
    %c0_i32_1 = arith.constant 0 : i32
    return %c0_i32, %c0_i32_0 : i32, i32
  }
  func.func @transform_5(%arg0: i32) -> (i32, i32) {
    %c0_i32 = arith.constant 0 : i32
    %c0_i32_0 = arith.constant 0 : i32
    %c0_i32_1 = arith.constant 0 : i32
    return %c0_i32, %c0_i32_0 : i32, i32
  }
  func.func @transform_6(%arg0: i32) -> (i32, i32) {
    %c0_i32 = arith.constant 0 : i32
    %c0_i32_0 = arith.constant 0 : i32
    %c0_i32_1 = arith.constant 0 : i32
    return %c0_i32, %c0_i32_0 : i32, i32
  }
  func.func @transform_7(%arg0: i32) -> (i32, i32) {
    %c0_i32 = arith.constant 0 : i32
    %c0_i32_0 = arith.constant 0 : i32
    %c0_i32_1 = arith.constant 0 : i32
    return %c0_i32, %c0_i32_0 : i32, i32
  }
  func.func @transform_8(%arg0: i32) -> (i32, i32) {
    %c0_i32 = arith.constant 0 : i32
    %c0_i32_0 = arith.constant 0 : i32
    %c0_i32_1 = arith.constant 0 : i32
    return %c0_i32, %c0_i32_0 : i32, i32
  }
  func.func @transform_9(%arg0: i32) -> (i32, i32) {
    %c0_i32 = arith.constant 0 : i32
    %c0_i32_0 = arith.constant 0 : i32
    return %arg0, %c0_i32 : i32, i32
  }
}

</mosaic_0001>

<llo_original>
// kernel: tpu_custom_call.1
$region0: #{tpu_custom_call.1}
  #allocation0 [shape = 'u32[]', space=smem, size = 0x4, offset = 0x4, fixed_abs, tag = 'smem constant byte address 0x4 - core index']
  #allocation1 [shape = 'u32[144,128]{1,0:T(1,128)}', space=vmem, size = 0x12000, scoped, tag = 'internal scratch']
  #allocation2 [shape = 'f32[2,128]{1,0:T(2,128)}', space=vmem, size = 0x400, scoped, tag = 'scratch operand']
  %s0 = inlined_call_operand.vmem [shape: bf16[16,32], index: 0, kind: input, shape index: {}]
  %s1 = inlined_call_operand.vmem [shape: bf16[32,64], index: 1, kind: input, shape index: {}]
  %s2 = inlined_call_operand.vmem [shape: f32[1,64], index: 2, kind: input, shape index: {}]
  %s3 = inlined_call_operand.vmem [shape: bf16[64,4], index: 3, kind: input, shape index: {}]
  %s4 = inlined_call_operand.vmem [shape: f32[1,4], index: 4, kind: input, shape index: {}]
  %s5 = inlined_call_operand.vmem [shape: bf16[64,32], index: 5, kind: input, shape index: {}]
  %s6 = inlined_call_operand.vmem [shape: f32[16,8], index: 6, kind: input, shape index: {}]
  %s7 = inlined_call_operand.vmem [shape: bf16[128,128], index: 7, kind: input, shape index: {}]
  %s8 = inlined_call_operand.vmem [shape: f32[1,128], index: 8, kind: input, shape index: {}]
  %s9 = inlined_call_operand.hbm [shape: f32[2,128], index: 9, kind: output, shape index: {}]
  %s10 = sld [smem:[#allocation0]]
  $region46: #{tpu_custom_call.1} parent=0
    _
  %s12 = ssub.s32 1, %s10
  %s13 = scalar_select 0, %s12, %s10
  $region1: #{tpu_custom_call.1} parent=0
    #allocation3 [shape = 'u8[1024]{0}', space=vmem, size = 0x400, scoped, tag = 'output window, operand 0, single buffered']
    #allocation4 [shape = 's32[1]{0}', space=sflag, size = 0x4, scoped, tag = 'scoped memory for tpu_custom_call.1']
    %14 = vsyncpa [#allocation4], 0
    // Predicated region
    $region2: #{tpu_custom_call.1} parent=1 // pred_check
      _
    $region3: #{tpu_custom_call.1} parent=1 // pred_check_branch
      %16 = sbr.rel (0) target = $region5
    $region4: #{tpu_custom_call.1} parent=1 // pred_region
      _
    $region5: #{tpu_custom_call.1} parent=1 // pred_fallthru
      _
    // Predicated region
    $region6: #{tpu_custom_call.1} parent=1 // pred_check
      _
    $region7: #{tpu_custom_call.1} parent=1 // pred_check_branch
      %18 = sbr.rel (0) target = $region9
    $region8: #{tpu_custom_call.1} parent=1 // pred_region
      _
    $region9: #{tpu_custom_call.1} parent=1 // pred_fallthru
      _
    // Predicated region
    $region10: #{tpu_custom_call.1} parent=1 // pred_check
      _
    $region11: #{tpu_custom_call.1} parent=1 // pred_check_branch
      %20 = sbr.rel (0) target = $region13
    $region12: #{tpu_custom_call.1} parent=1 // pred_region
      _
    $region13: #{tpu_custom_call.1} parent=1 // pred_fallthru
      _
    // Predicated region
    $region14: #{tpu_custom_call.1} parent=1 // pred_check
      _
    $region15: #{tpu_custom_call.1} parent=1 // pred_check_branch
      %22 = sbr.rel (0) target = $region17
    $region16: #{tpu_custom_call.1} parent=1 // pred_region
      _
    $region17: #{tpu_custom_call.1} parent=1 // pred_fallthru
      _
    // Predicated region
    $region18: #{tpu_custom_call.1} parent=1 // pred_check
      _
    $region19: #{tpu_custom_call.1} parent=1 // pred_check_branch
      %24 = sbr.rel (0) target = $region21
    $region20: #{tpu_custom_call.1} parent=1 // pred_region
      _
    $region21: #{tpu_custom_call.1} parent=1 // pred_fallthru
      _
    // Predicated region
    $region22: #{tpu_custom_call.1} parent=1 // pred_check
      _
    $region23: #{tpu_custom_call.1} parent=1 // pred_check_branch
      %26 = sbr.rel (0) target = $region25
    $region24: #{tpu_custom_call.1} parent=1 // pred_region
      _
    $region25: #{tpu_custom_call.1} parent=1 // pred_fallthru
      _
    // Predicated region
    $region26: #{tpu_custom_call.1} parent=1 // pred_check
      _
    $region27: #{tpu_custom_call.1} parent=1 // pred_check_branch
      %28 = sbr.rel (0) target = $region29
    $region28: #{tpu_custom_call.1} parent=1 // pred_region
      _
    $region29: #{tpu_custom_call.1} parent=1 // pred_fallthru
      _
    // Predicated region
    $region30: #{tpu_custom_call.1} parent=1 // pred_check
      _
    $region31: #{tpu_custom_call.1} parent=1 // pred_check_branch
      %30 = sbr.rel (0) target = $region33
    $region32: #{tpu_custom_call.1} parent=1 // pred_region
      _
    $region33: #{tpu_custom_call.1} parent=1 // pred_fallthru
      _
    // Predicated region
    $region34: #{tpu_custom_call.1} parent=1 // pred_check
      _
    $region35: #{tpu_custom_call.1} parent=1 // pred_check_branch
      %32 = sbr.rel (0) target = $region37
    $region36: #{tpu_custom_call.1} parent=1 // pred_region
      _
    $region37: #{tpu_custom_call.1} parent=1 // pred_fallthru
      _
    %v34 = vld [vmem:[%s0] sm:$0xf]
    %v35 = vld [vmem:[%s0 + $0x4] sm:$0xf]
    %v36 = vld [vmem:[%s1] sm:$0xf]
    %v37 = vld [vmem:[%s1 + $0x4] sm:$0xf]
    %v38 = vld [vmem:[%s1 + $0x8] sm:$0xf]
    %v39 = vld [vmem:[%s1 + $0xc] sm:$0xf]
    %v40 = vld [vmem:[%s2] sm:$0x1]
    %v42 = vlaneseq
    %v43 = vshrl.u32 %v42, 7
    %v44 = vsub.s32 0, %v43
    %v45 = vrot.slane %v40, %v44
    %v49 = vunpack.c.l.b16 %v34
    %v50 = vunpack.c.l.b16 %v35
    %v51 = vpack.c.b16 %v50, %v49
    %v56 = vunpack.c.l.b16 %v36
    %v57 = vunpack.c.l.b16 %v37
    %v58 = vunpack.c.l.b16 %v38
    %v59 = vunpack.c.l.b16 %v39
    %v60 = vpack.c.b16 %v57, %v56
    %v61 = vpack.c.b16 %v59, %v58
    %vm64 = vcmask 261120
    %v66 = vsel %vm64, %v51, 0
    %68 = vmatprep.subr.bf16.mxu0 0
    %69 = vmatpush1.bf16.msra.mxu0 0
    %70 = vmatprep.subr.bf16.mxu0 0
    %71 = vmatpush1.bf16.msra.mxu0 0
    %72 = vmatprep.subr.bf16.mxu0 0
    %73 = vmatpush1.bf16.msra.mxu0 0
    %74 = vmatprep.subr.bf16.mxu0 0
    %75 = vmatpush1.bf16.msra.mxu0 0
    %76 = vmatprep.subr.bf16.mxu0 0
    %77 = vmatpush1.bf16.msra.mxu0 0
    %78 = vmatprep.subr.bf16.mxu0 0
    %79 = vmatpush1.bf16.msra.mxu0 0
    %80 = vmatprep.subr.bf16.mxu0 0
    %81 = vmatpush1.bf16.msra.mxu0 %v61
    %82 = vmatprep.subr.bf16.mxu0 0
    %83 = vmatpush1.bf16.msra.mxu0 %v60
    %84 = vmatprep.subr.bf16.mxu0 0
    %85 = vmatpush2.bf16.msra.mxu0 0
    %86 = vmatprep.subr.bf16.mxu0 0
    %87 = vmatpush2.bf16.msra.mxu0 0
    %88 = vmatprep.subr.bf16.mxu0 0
    %89 = vmatpush2.bf16.msra.mxu0 0
    %90 = vmatprep.subr.bf16.mxu0 0
    %91 = vmatpush2.bf16.msra.mxu0 0
    %92 = vmatprep.subr.bf16.mxu0 0
    %93 = vmatpush2.bf16.msra.mxu0 0
    %94 = vmatprep.subr.bf16.mxu0 0
    %95 = vmatpush2.bf16.msra.mxu0 0
    %96 = vmatprep.subr.bf16.mxu0 0
    %97 = vmatpush2.bf16.msra.mxu0 0
    %98 = vmatprep.subr.bf16.mxu0 0
    %99 = vmatpush2.bf16.msra.mxu0 0
    %100 = vmatprep.mubr.bf16.mxu0 0
    %101 = vmatmul.mubr.bf16.gmra.mxu0 %v66
    %v102 = vpop.f32.mrf.mxu0
    %v103 = vadd.f32 %v45, %v102
    %v104 = vpop.f32.mrf.mxu0
    %v105 = vpop.f32.mrf.mxu0
    %v106 = vadd.f32 %v45, %v105
    %v107 = vpop.f32.mrf.mxu0
    %108 = vdwg.mxu0
    %v109 = vpack.c.bf16 %v106, %v103
    %v110 = vld [vmem:[%s3] sm:$0xf]
    %v111 = vld [vmem:[%s3 + $0x4] sm:$0xf]
    %v112 = vld [vmem:[%s3 + $0x8] sm:$0xf]
    %v113 = vld [vmem:[%s3 + $0xc] sm:$0xf]
    %v114 = vld [vmem:[%s3 + $0x10] sm:$0xf]
    %v115 = vld [vmem:[%s3 + $0x14] sm:$0xf]
    %v116 = vld [vmem:[%s3 + $0x18] sm:$0xf]
    %v117 = vld [vmem:[%s3 + $0x1c] sm:$0xf]
    %v118 = vld [vmem:[%s4] sm:$0x1]
    %v120 = vlaneseq
    %v121 = vshrl.u32 %v120, 7
    %v122 = vsub.s32 0, %v121
    %v123 = vrot.slane %v118, %v122
    %v133 = vunpack.c.l.b16 %v110
    %v134 = vunpack.c.l.b16 %v111
    %v135 = vunpack.c.l.b16 %v112
    %v136 = vunpack.c.l.b16 %v113
    %v137 = vunpack.c.l.b16 %v114
    %v138 = vunpack.c.l.b16 %v115
    %v139 = vunpack.c.l.b16 %v116
    %v140 = vunpack.c.l.b16 %v117
    %v141 = vpack.c.b16 %v134, %v133
    %v142 = vpack.c.b16 %v136, %v135
    %v143 = vpack.c.b16 %v138, %v137
    %v144 = vpack.c.b16 %v140, %v139
    %vm149 = vcmask 523264
    %v151 = vsel %vm149, %v109, 0
    %153 = vmatprep.subr.bf16.mxu0 0
    %154 = vmatpush1.bf16.msra.mxu0 0
    %155 = vmatprep.subr.bf16.mxu0 0
    %156 = vmatpush1.bf16.msra.mxu0 0
    %157 = vmatprep.subr.bf16.mxu0 0
    %158 = vmatpush1.bf16.msra.mxu0 0
    %159 = vmatprep.subr.bf16.mxu0 0
    %160 = vmatpush1.bf16.msra.mxu0 0
    %161 = vmatprep.subr.bf16.mxu0 0
    %162 = vmatpush1.bf16.msra.mxu0 %v144
    %163 = vmatprep.subr.bf16.mxu0 0
    %164 = vmatpush1.bf16.msra.mxu0 %v143
    %165 = vmatprep.subr.bf16.mxu0 0
    %166 = vmatpush1.bf16.msra.mxu0 %v142
    %167 = vmatprep.subr.bf16.mxu0 0
    %168 = vmatpush1.bf16.msra.mxu0 %v141
    %169 = vmatprep.subr.bf16.mxu0 0
    %170 = vmatpush2.bf16.msra.mxu0 0
    %171 = vmatprep.subr.bf16.mxu0 0
    %172 = vmatpush2.bf16.msra.mxu0 0
    %173 = vmatprep.subr.bf16.mxu0 0
    %174 = vmatpush2.bf16.msra.mxu0 0
    %175 = vmatprep.subr.bf16.mxu0 0
    %176 = vmatpush2.bf16.msra.mxu0 0
    %177 = vmatprep.subr.bf16.mxu0 0
    %178 = vmatpush2.bf16.msra.mxu0 0
    %179 = vmatprep.subr.bf16.mxu0 0
    %180 = vmatpush2.bf16.msra.mxu0 0
    %181 = vmatprep.subr.bf16.mxu0 0
    %182 = vmatpush2.bf16.msra.mxu0 0
    %183 = vmatprep.subr.bf16.mxu0 0
    %184 = vmatpush2.bf16.msra.mxu0 0
    %185 = vmatprep.mubr.bf16.mxu0 0
    %186 = vmatmul.mubr.bf16.gmra.mxu0 %v151
    %v187 = vpop.f32.mrf.mxu0
    %v188 = vadd.f32 %v123, %v187
    %v189 = vpop.f32.mrf.mxu0
    %v190 = vpop.f32.mrf.mxu0
    %v191 = vadd.f32 %v123, %v190
    %v192 = vpop.f32.mrf.mxu0
    %193 = vdwg.mxu0
    %v194 = vxor.u32 %v188, 2147483648
    %v195 = vxor.u32 %v191, 2147483648
    %v196 = vmul.f32 %v194, 1.442695
    %v197 = vpow.pop %v196
    %v198 = vmul.f32 %v195, 1.442695
    %v199 = vpow.pop %v198
    %v200 = vadd.f32 %v197, 1.0
    %v201 = vadd.f32 %v199, 1.0
    %v202 = vrcp.pop %v200
    %v203 = vmul.f32 1.0, %v202
    %v204 = vrcp.pop %v201
    %v205 = vmul.f32 1.0, %v204
    %v206 = vld [vmem:[%s5] sm:$0xf]
    %v207 = vld [vmem:[%s5 + $0x4] sm:$0xf]
    %v208 = vld [vmem:[%s5 + $0x8] sm:$0xf]
    %v209 = vld [vmem:[%s5 + $0xc] sm:$0xf]
    %v210 = vld [vmem:[%s5 + $0x10] sm:$0xf]
    %v211 = vld [vmem:[%s5 + $0x14] sm:$0xf]
    %v212 = vld [vmem:[%s5 + $0x18] sm:$0xf]
    %v213 = vld [vmem:[%s5 + $0x1c] sm:$0xf]
    %v222 = vunpack.c.l.b16 %v206
    %v223 = vunpack.c.l.b16 %v207
    %v224 = vunpack.c.l.b16 %v208
    %v225 = vunpack.c.l.b16 %v209
    %v226 = vunpack.c.l.b16 %v210
    %v227 = vunpack.c.l.b16 %v211
    %v228 = vunpack.c.l.b16 %v212
    %v229 = vunpack.c.l.b16 %v213
    %v230 = vpack.c.b16 %v223, %v222
    %v231 = vpack.c.b16 %v225, %v224
    %v232 = vpack.c.b16 %v227, %v226
    %v233 = vpack.c.b16 %v229, %v228
    %238 = vmatprep.subr.bf16.mxu0 0
    %239 = vmatpush1.bf16.msra.mxu0 0
    %240 = vmatprep.subr.bf16.mxu0 0
    %241 = vmatpush1.bf16.msra.mxu0 0
    %242 = vmatprep.subr.bf16.mxu0 0
    %243 = vmatpush1.bf16.msra.mxu0 0
    %244 = vmatprep.subr.bf16.mxu0 0
    %245 = vmatpush1.bf16.msra.mxu0 0
    %246 = vmatprep.subr.bf16.mxu0 0
    %247 = vmatpush1.bf16.msra.mxu0 %v233
    %248 = vmatprep.subr.bf16.mxu0 0
    %249 = vmatpush1.bf16.msra.mxu0 %v232
    %250 = vmatprep.subr.bf16.mxu0 0
    %251 = vmatpush1.bf16.msra.mxu0 %v231
    %252 = vmatprep.subr.bf16.mxu0 0
    %253 = vmatpush1.bf16.msra.mxu0 %v230
    %254 = vmatprep.subr.bf16.mxu0 0
    %255 = vmatpush2.bf16.msra.mxu0 0
    %256 = vmatprep.subr.bf16.mxu0 0
    %257 = vmatpush2.bf16.msra.mxu0 0
    %258 = vmatprep.subr.bf16.mxu0 0
    %259 = vmatpush2.bf16.msra.mxu0 0
    %260 = vmatprep.subr.bf16.mxu0 0
    %261 = vmatpush2.bf16.msra.mxu0 0
    %262 = vmatprep.subr.bf16.mxu0 0
    %263 = vmatpush2.bf16.msra.mxu0 0
    %264 = vmatprep.subr.bf16.mxu0 0
    %265 = vmatpush2.bf16.msra.mxu0 0
    %266 = vmatprep.subr.bf16.mxu0 0
    %267 = vmatpush2.bf16.msra.mxu0 0
    %268 = vmatprep.subr.bf16.mxu0 0
    %269 = vmatpush2.bf16.msra.mxu0 0
    %270 = vmatprep.mubr.bf16.mxu0 0
    %271 = vmatmul.mubr.bf16.gmra.mxu0 %v151
    %v272 = vpop.f32.mrf.mxu0
    %v273 = vadd.f32 0.0, %v272
    %v274 = vpop.f32.mrf.mxu0
    %v275 = vpop.f32.mrf.mxu0
    %v276 = vadd.f32 0.0, %v275
    %v277 = vpop.f32.mrf.mxu0
    %278 = vdwg.mxu0
    %vm279 = vcmask 64512
    %v280 = vsel %vm279, %v273, -inf
    %281 = vmax.xlane.f32.xlu0 %v280
    %v282 = vpop.xlane.xlu0 %281
    %v283 = vsel %vm279, %v276, -inf
    %284 = vmax.xlane.f32.xlu0 %v283
    %v285 = vpop.xlane.xlu0 %284
    %v286 = vsub.f32 %v273, %v282
    %v287 = vsub.f32 %v276, %v285
    %v288 = vmul.f32 %v286, 1.442695
    %v289 = vpow.pop %v288
    %v290 = vmul.f32 %v287, 1.442695
    %v291 = vpow.pop %v290
    %v292 = vsel %vm279, %v289, 0.0
    %293 = vadd.xlane.f32.xlu0 %v292
    %v294 = vpop.xlane.xlu0 %293
    %v295 = vsel %vm279, %v291, 0.0
    %296 = vadd.xlane.f32.xlu0 %v295
    %v297 = vpop.xlane.xlu0 %296
    %v298 = vrcp.pop %v294
    %v299 = vrcp.pop %v297
    %v300 = vmul.f32 %v289, %v298
    %v301 = vmul.f32 %v291, %v299
    %303 = vset.pattern.permute.xlu0 0
    %304 = vperm.xlu0 %303, %v203
    %v305 = vpop.permute.xlu0 %304
    %308 = vset.pattern.permute.xlu0 0
    %309 = vperm.xlu0 %308, %v205
    %v310 = vpop.permute.xlu0 %309
    %v312 = vmul.f32 %v300, %v305
    %v313 = vmul.f32 %v301, %v310
    %v315 = vunpack.c.l.b16 %v109
    %v316 = vunpack.c.h.b16 %v109
    %v317 = vpack.c.b16 %v315, %v315
    %v318 = vpack.c.b16 %v316, %v316
    %v321 = vsel %vm279, %v312, 0.0
    %v322 = vrot.slane %v321, 4
    %v323 = vadd.f32 %v321, %v322
    %v324 = vrot.slane %v323, 2
    %v325 = vadd.f32 %v323, %v324
    %v326 = vrot.slane %v325, 1
    %v327 = vadd.f32 %v325, %v326
    %v328 = vsel %vm279, %v313, 0.0
    %v329 = vrot.slane %v328, 4
    %v330 = vadd.f32 %v328, %v329
    %v331 = vrot.slane %v330, 2
    %v332 = vadd.f32 %v330, %v331
    %v333 = vrot.slane %v332, 1
    %v334 = vadd.f32 %v332, %v333
    %v335 = vadd.f32 %v327, 0.0
    %v336 = vadd.f32 %v334, 0.0
    %v337 = vpack.c.bf16 %v312, %v312
    %v338 = vpack.c.bf16 %v313, %v313
    %vm339 = vcmask 130112
    %v340 = vsel %vm339, %v273, -inf
    %341 = vmax.xlane.f32.xlu0 %v340
    %v342 = vpop.xlane.xlu0 %341
    %v343 = vsel %vm339, %v276, -inf
    %344 = vmax.xlane.f32.xlu0 %v343
    %v345 = vpop.xlane.xlu0 %344
    %v346 = vsub.f32 %v273, %v342
    %v347 = vsub.f32 %v276, %v345
    %v348 = vmul.f32 %v346, 1.442695
    %v349 = vpow.pop %v348
    %v350 = vmul.f32 %v347, 1.442695
    %v351 = vpow.pop %v350
    %354 = vrot.lane.b32.xlu0 %v349, 120
    %v355 = vpop.permute.xlu0 %354
    %356 = vrot.lane.b32.xlu0 %v351, 120
    %v357 = vpop.permute.xlu0 %356
    %v360 = vsel %vm279, %v355, 0.0
    %361 = vadd.xlane.f32.xlu0 %v360
    %v362 = vpop.xlane.xlu0 %361
    %v363 = vsel %vm279, %v357, 0.0
    %364 = vadd.xlane.f32.xlu0 %v363
    %v365 = vpop.xlane.xlu0 %364
    %v366 = vrcp.pop %v362
    %v367 = vrcp.pop %v365
    %v368 = vmul.f32 %v349, %v366
    %v369 = vmul.f32 %v351, %v367
    %370 = vset.pattern.permute.xlu0 1
    %371 = vperm.xlu0 %370, %v203
    %v372 = vpop.permute.xlu0 %371
    %374 = vset.pattern.permute.xlu0 1
    %375 = vperm.xlu0 %374, %v205
    %v376 = vpop.permute.xlu0 %375
    %v378 = vmul.f32 %v368, %v372
    %v379 = vmul.f32 %v369, %v376
    %v380 = vsel %vm339, %v378, 0.0
    %v381 = vrot.slane %v380, 4
    %v382 = vadd.f32 %v380, %v381
    %v383 = vrot.slane %v382, 2
    %v384 = vadd.f32 %v382, %v383
    %v385 = vrot.slane %v384, 1
    %v386 = vadd.f32 %v384, %v385
    %v387 = vsel %vm339, %v379, 0.0
    %v388 = vrot.slane %v387, 4
    %v389 = vadd.f32 %v387, %v388
    %v390 = vrot.slane %v389, 2
    %v391 = vadd.f32 %v389, %v390
    %v392 = vrot.slane %v391, 1
    %v393 = vadd.f32 %v391, %v392
    %396 = vrot.lane.b32.xlu0 %v386, 120
    %v397 = vpop.permute.xlu0 %396
    %398 = vrot.lane.b32.xlu0 %v393, 120
    %v399 = vpop.permute.xlu0 %398
    %v402 = vadd.f32 %v335, %v397
    %v403 = vadd.f32 %v336, %v399
    %v404 = vpack.c.bf16 %v378, %v378
    %v405 = vpack.c.bf16 %v379, %v379
    %406 = vrot.lane.b32.xlu0 %v317, 112
    %v407 = vpop.permute.xlu0 %406
    %409 = vxpose.xlu0.c.b16.start [1/8] %v407, 128
    %410 = vxpose.xlu0.c.b16.cont [2/8] 0, 128
    %411 = vxpose.xlu0.c.b16.cont [3/8] 0, 128
    %412 = vxpose.xlu0.c.b16.cont [4/8] 0, 128
    %413 = vxpose.xlu0.c.b16.cont [5/8] 0, 128
    %414 = vxpose.xlu0.c.b16.cont [6/8] 0, 128
    %415 = vxpose.xlu0.c.b16.cont [7/8] 0, 128
    %416 = vxpose.xlu0.c.b16.end [8/8] 0, 128
    %v417 = vpop.trf.xlu0
    %v418 = vpop.trf.xlu0
    %v419 = vpop.trf.xlu0
    %v420 = vpop.trf.xlu0
    %v421 = vpop.trf.xlu0
    %v422 = vpop.trf.xlu0
    %v423 = vpop.trf.xlu0
    %v424 = vpop.trf.xlu0
    %426 = vrot.lane.b32.xlu0 %v404, 120
    %v427 = vpop.permute.xlu0 %426
    %v429 = vsel %vm279, %v417, 0
    %vm431 = vcmask 1043456
    %v433 = vsel %vm431, %v427, 0
    %435 = vmatprep.subr.bf16.mxu0 0
    %436 = vmatpush1.bf16.msra.mxu0 0
    %437 = vmatprep.subr.bf16.mxu0 0
    %438 = vmatpush1.bf16.msra.mxu0 0
    %439 = vmatprep.subr.bf16.mxu0 0
    %440 = vmatpush1.bf16.msra.mxu0 0
    %441 = vmatprep.subr.bf16.mxu0 0
    %442 = vmatpush1.bf16.msra.mxu0 0
    %443 = vmatprep.subr.bf16.mxu0 0
    %444 = vmatpush1.bf16.msra.mxu0 0
    %445 = vmatprep.subr.bf16.mxu0 0
    %446 = vmatpush1.bf16.msra.mxu0 0
    %447 = vmatprep.subr.bf16.mxu0 0
    %448 = vmatpush1.bf16.msra.mxu0 0
    %449 = vmatprep.subr.bf16.mxu0 0
    %450 = vmatpush1.bf16.msra.mxu0 %v433
    %451 = vmatprep.subr.bf16.mxu0 0
    %452 = vmatpush2.bf16.msra.mxu0 0
    %453 = vmatprep.subr.bf16.mxu0 0
    %454 = vmatpush2.bf16.msra.mxu0 0
    %455 = vmatprep.subr.bf16.mxu0 0
    %456 = vmatpush2.bf16.msra.mxu0 0
    %457 = vmatprep.subr.bf16.mxu0 0
    %458 = vmatpush2.bf16.msra.mxu0 0
    %459 = vmatprep.subr.bf16.mxu0 0
    %460 = vmatpush2.bf16.msra.mxu0 0
    %461 = vmatprep.subr.bf16.mxu0 0
    %462 = vmatpush2.bf16.msra.mxu0 0
    %463 = vmatprep.subr.bf16.mxu0 0
    %464 = vmatpush2.bf16.msra.mxu0 0
    %465 = vmatprep.subr.bf16.mxu0 0
    %466 = vmatpush2.bf16.msra.mxu0 0
    %467 = vmatprep.mubr.bf16.mxu0 0
    %468 = vmatmul.mubr.bf16.gmra.mxu0 %v429
    %v469 = vpop.f32.mrf.mxu0
    %v470 = vadd.f32 0.0, %v469
    %v471 = vpop.f32.mrf.mxu0
    %v472 = vpop.f32.mrf.mxu0
    %v473 = vadd.f32 0.0, %v472
    %v474 = vpop.f32.mrf.mxu0
    %475 = vdwg.mxu0
    %476 = vrot.lane.b32.xlu0 %v318, 112
    %v477 = vpop.permute.xlu0 %476
    %479 = vxpose.xlu0.c.b16.start [1/8] %v477, 128
    %480 = vxpose.xlu0.c.b16.cont [2/8] 0, 128
    %481 = vxpose.xlu0.c.b16.cont [3/8] 0, 128
    %482 = vxpose.xlu0.c.b16.cont [4/8] 0, 128
    %483 = vxpose.xlu0.c.b16.cont [5/8] 0, 128
    %484 = vxpose.xlu0.c.b16.cont [6/8] 0, 128
    %485 = vxpose.xlu0.c.b16.cont [7/8] 0, 128
    %486 = vxpose.xlu0.c.b16.end [8/8] 0, 128
    %v487 = vpop.trf.xlu0
    %v488 = vpop.trf.xlu0
    %v489 = vpop.trf.xlu0
    %v490 = vpop.trf.xlu0
    %v491 = vpop.trf.xlu0
    %v492 = vpop.trf.xlu0
    %v493 = vpop.trf.xlu0
    %v494 = vpop.trf.xlu0
    %496 = vrot.lane.b32.xlu0 %v405, 120
    %v497 = vpop.permute.xlu0 %496
    %v499 = vsel %vm279, %v487, 0
    %v502 = vsel %vm431, %v497, 0
    %504 = vmatprep.subr.bf16.mxu0 0
    %505 = vmatpush1.bf16.msra.mxu0 0
    %506 = vmatprep.subr.bf16.mxu0 0
    %507 = vmatpush1.bf16.msra.mxu0 0
    %508 = vmatprep.subr.bf16.mxu0 0
    %509 = vmatpush1.bf16.msra.mxu0 0
    %510 = vmatprep.subr.bf16.mxu0 0
    %511 = vmatpush1.bf16.msra.mxu0 0
    %512 = vmatprep.subr.bf16.mxu0 0
    %513 = vmatpush1.bf16.msra.mxu0 0
    %514 = vmatprep.subr.bf16.mxu0 0
    %515 = vmatpush1.bf16.msra.mxu0 0
    %516 = vmatprep.subr.bf16.mxu0 0
    %517 = vmatpush1.bf16.msra.mxu0 0
    %518 = vmatprep.subr.bf16.mxu0 0
    %519 = vmatpush1.bf16.msra.mxu0 %v502
    %520 = vmatprep.subr.bf16.mxu0 0
    %521 = vmatpush2.bf16.msra.mxu0 0
    %522 = vmatprep.subr.bf16.mxu0 0
    %523 = vmatpush2.bf16.msra.mxu0 0
    %524 = vmatprep.subr.bf16.mxu0 0
    %525 = vmatpush2.bf16.msra.mxu0 0
    %526 = vmatprep.subr.bf16.mxu0 0
    %527 = vmatpush2.bf16.msra.mxu0 0
    %528 = vmatprep.subr.bf16.mxu0 0
    %529 = vmatpush2.bf16.msra.mxu0 0
    %530 = vmatprep.subr.bf16.mxu0 0
    %531 = vmatpush2.bf16.msra.mxu0 0
    %532 = vmatprep.subr.bf16.mxu0 0
    %533 = vmatpush2.bf16.msra.mxu0 0
    %534 = vmatprep.subr.bf16.mxu0 0
    %535 = vmatpush2.bf16.msra.mxu0 0
    %536 = vmatprep.mubr.bf16.mxu0 0
    %537 = vmatmul.mubr.bf16.gmra.mxu0 %v499
    %v538 = vpop.f32.mrf.mxu0
    %v539 = vadd.f32 0.0, %v538
    %v540 = vpop.f32.mrf.mxu0
    %v541 = vpop.f32.mrf.mxu0
    %v542 = vadd.f32 0.0, %v541
    %v543 = vpop.f32.mrf.mxu0
    %544 = vdwg.mxu0
    %545 = vxpose.xlu0.c.b16.start [1/8] %v317, 128
    %546 = vxpose.xlu0.c.b16.cont [2/8] 0, 128
    %547 = vxpose.xlu0.c.b16.cont [3/8] 0, 128
    %548 = vxpose.xlu0.c.b16.cont [4/8] 0, 128
    %549 = vxpose.xlu0.c.b16.cont [5/8] 0, 128
    %550 = vxpose.xlu0.c.b16.cont [6/8] 0, 128
    %551 = vxpose.xlu0.c.b16.cont [7/8] 0, 128
    %552 = vxpose.xlu0.c.b16.end [8/8] 0, 128
    %v553 = vpop.trf.xlu0
    %v554 = vpop.trf.xlu0
    %v555 = vpop.trf.xlu0
    %v556 = vpop.trf.xlu0
    %v557 = vpop.trf.xlu0
    %v558 = vpop.trf.xlu0
    %v559 = vpop.trf.xlu0
    %v560 = vpop.trf.xlu0
    %v562 = vsel %vm279, %v553, 0
    %v565 = vsel %vm431, %v337, 0
    %567 = vmatprep.subr.bf16.mxu0 0
    %568 = vmatpush1.bf16.msra.mxu0 0
    %569 = vmatprep.subr.bf16.mxu0 0
    %570 = vmatpush1.bf16.msra.mxu0 0
    %571 = vmatprep.subr.bf16.mxu0 0
    %572 = vmatpush1.bf16.msra.mxu0 0
    %573 = vmatprep.subr.bf16.mxu0 0
    %574 = vmatpush1.bf16.msra.mxu0 0
    %575 = vmatprep.subr.bf16.mxu0 0
    %576 = vmatpush1.bf16.msra.mxu0 0
    %577 = vmatprep.subr.bf16.mxu0 0
    %578 = vmatpush1.bf16.msra.mxu0 0
    %579 = vmatprep.subr.bf16.mxu0 0
    %580 = vmatpush1.bf16.msra.mxu0 0
    %581 = vmatprep.subr.bf16.mxu0 0
    %582 = vmatpush1.bf16.msra.mxu0 %v565
    %583 = vmatprep.subr.bf16.mxu0 0
    %584 = vmatpush2.bf16.msra.mxu0 0
    %585 = vmatprep.subr.bf16.mxu0 0
    %586 = vmatpush2.bf16.msra.mxu0 0
    %587 = vmatprep.subr.bf16.mxu0 0
    %588 = vmatpush2.bf16.msra.mxu0 0
    %589 = vmatprep.subr.bf16.mxu0 0
    %590 = vmatpush2.bf16.msra.mxu0 0
    %591 = vmatprep.subr.bf16.mxu0 0
    %592 = vmatpush2.bf16.msra.mxu0 0
    %593 = vmatprep.subr.bf16.mxu0 0
    %594 = vmatpush2.bf16.msra.mxu0 0
    %595 = vmatprep.subr.bf16.mxu0 0
    %596 = vmatpush2.bf16.msra.mxu0 0
    %597 = vmatprep.subr.bf16.mxu0 0
    %598 = vmatpush2.bf16.msra.mxu0 0
    %599 = vmatprep.mubr.bf16.mxu0 0
    %600 = vmatmul.mubr.bf16.gmra.mxu0 %v562
    %v601 = vpop.f32.mrf.mxu0
    %v602 = vadd.f32 %v470, %v601
    %v603 = vpop.f32.mrf.mxu0
    %v604 = vpop.f32.mrf.mxu0
    %v605 = vadd.f32 %v473, %v604
    %v606 = vpop.f32.mrf.mxu0
    %607 = vdwg.mxu0
    %608 = vxpose.xlu0.c.b16.start [1/8] %v318, 128
    %609 = vxpose.xlu0.c.b16.cont [2/8] 0, 128
    %610 = vxpose.xlu0.c.b16.cont [3/8] 0, 128
    %611 = vxpose.xlu0.c.b16.cont [4/8] 0, 128
    %612 = vxpose.xlu0.c.b16.cont [5/8] 0, 128
    %613 = vxpose.xlu0.c.b16.cont [6/8] 0, 128
    %614 = vxpose.xlu0.c.b16.cont [7/8] 0, 128
    %615 = vxpose.xlu0.c.b16.end [8/8] 0, 128
    %v616 = vpop.trf.xlu0
    %v617 = vpop.trf.xlu0
    %v618 = vpop.trf.xlu0
    %v619 = vpop.trf.xlu0
    %v620 = vpop.trf.xlu0
    %v621 = vpop.trf.xlu0
    %v622 = vpop.trf.xlu0
    %v623 = vpop.trf.xlu0
    %v625 = vsel %vm279, %v616, 0
    %v628 = vsel %vm431, %v338, 0
    %630 = vmatprep.subr.bf16.mxu0 0
    %631 = vmatpush1.bf16.msra.mxu0 0
    %632 = vmatprep.subr.bf16.mxu0 0
    %633 = vmatpush1.bf16.msra.mxu0 0
    %634 = vmatprep.subr.bf16.mxu0 0
    %635 = vmatpush1.bf16.msra.mxu0 0
    %636 = vmatprep.subr.bf16.mxu0 0
    %637 = vmatpush1.bf16.msra.mxu0 0
    %638 = vmatprep.subr.bf16.mxu0 0
    %639 = vmatpush1.bf16.msra.mxu0 0
    %640 = vmatprep.subr.bf16.mxu0 0
    %641 = vmatpush1.bf16.msra.mxu0 0
    %642 = vmatprep.subr.bf16.mxu0 0
    %643 = vmatpush1.bf16.msra.mxu0 0
    %644 = vmatprep.subr.bf16.mxu0 0
    %645 = vmatpush1.bf16.msra.mxu0 %v628
    %646 = vmatprep.subr.bf16.mxu0 0
    %647 = vmatpush2.bf16.msra.mxu0 0
    %648 = vmatprep.subr.bf16.mxu0 0
    %649 = vmatpush2.bf16.msra.mxu0 0
    %650 = vmatprep.subr.bf16.mxu0 0
    %651 = vmatpush2.bf16.msra.mxu0 0
    %652 = vmatprep.subr.bf16.mxu0 0
    %653 = vmatpush2.bf16.msra.mxu0 0
    %654 = vmatprep.subr.bf16.mxu0 0
    %655 = vmatpush2.bf16.msra.mxu0 0
    %656 = vmatprep.subr.bf16.mxu0 0
    %657 = vmatpush2.bf16.msra.mxu0 0
    %658 = vmatprep.subr.bf16.mxu0 0
    %659 = vmatpush2.bf16.msra.mxu0 0
    %660 = vmatprep.subr.bf16.mxu0 0
    %661 = vmatpush2.bf16.msra.mxu0 0
    %662 = vmatprep.mubr.bf16.mxu0 0
    %663 = vmatmul.mubr.bf16.gmra.mxu0 %v625
    %v664 = vpop.f32.mrf.mxu0
    %v665 = vadd.f32 %v539, %v664
    %v666 = vpop.f32.mrf.mxu0
    %v667 = vpop.f32.mrf.mxu0
    %v668 = vadd.f32 %v542, %v667
    %v669 = vpop.f32.mrf.mxu0
    %670 = vdwg.mxu0
    %vm671 = vcmask 195712
    %v672 = vsel %vm671, %v273, -inf
    %673 = vmax.xlane.f32.xlu0 %v672
    %v674 = vpop.xlane.xlu0 %673
    %v675 = vsel %vm671, %v276, -inf
    %676 = vmax.xlane.f32.xlu0 %v675
    %v677 = vpop.xlane.xlu0 %676
    %v678 = vsub.f32 %v273, %v674
    %v679 = vsub.f32 %v276, %v677
    %v680 = vmul.f32 %v678, 1.442695
    %v681 = vpow.pop %v680
    %v682 = vmul.f32 %v679, 1.442695
    %v683 = vpow.pop %v682
    %686 = vrot.lane.b32.xlu0 %v681, 112
    %v687 = vpop.permute.xlu0 %686
    %688 = vrot.lane.b32.xlu0 %v683, 112
    %v689 = vpop.permute.xlu0 %688
    %v692 = vsel %vm279, %v687, 0.0
    %693 = vadd.xlane.f32.xlu0 %v692
    %v694 = vpop.xlane.xlu0 %693
    %v695 = vsel %vm279, %v689, 0.0
    %696 = vadd.xlane.f32.xlu0 %v695
    %v697 = vpop.xlane.xlu0 %696
    %v698 = vrcp.pop %v694
    %v699 = vrcp.pop %v697
    %v700 = vmul.f32 %v681, %v698
    %v701 = vmul.f32 %v683, %v699
    %702 = vset.pattern.permute.xlu0 2
    %703 = vperm.xlu0 %702, %v203
    %v704 = vpop.permute.xlu0 %703
    %706 = vset.pattern.permute.xlu0 2
    %707 = vperm.xlu0 %706, %v205
    %v708 = vpop.permute.xlu0 %707
    %v710 = vmul.f32 %v700, %v704
    %v711 = vmul.f32 %v701, %v708
    %v712 = vsel %vm671, %v710, 0.0
    %v713 = vrot.slane %v712, 4
    %v714 = vadd.f32 %v712, %v713
    %v715 = vrot.slane %v714, 2
    %v716 = vadd.f32 %v714, %v715
    %v717 = vrot.slane %v716, 1
    %v718 = vadd.f32 %v716, %v717
    %v719 = vsel %vm671, %v711, 0.0
    %v720 = vrot.slane %v719, 4
    %v721 = vadd.f32 %v719, %v720
    %v722 = vrot.slane %v721, 2
    %v723 = vadd.f32 %v721, %v722
    %v724 = vrot.slane %v723, 1
    %v725 = vadd.f32 %v723, %v724
    %728 = vrot.lane.b32.xlu0 %v718, 112
    %v729 = vpop.permute.xlu0 %728
    %730 = vrot.lane.b32.xlu0 %v725, 112
    %v731 = vpop.permute.xlu0 %730
    %v734 = vadd.f32 %v402, %v729
    %v735 = vadd.f32 %v403, %v731
    %v736 = vpack.c.bf16 %v710, %v710
    %v737 = vpack.c.bf16 %v711, %v711
    %738 = vrot.lane.b32.xlu0 %v317, 96
    %v739 = vpop.permute.xlu0 %738
    %741 = vxpose.xlu0.c.b16.start [1/8] %v739, 128
    %742 = vxpose.xlu0.c.b16.cont [2/8] 0, 128
    %743 = vxpose.xlu0.c.b16.cont [3/8] 0, 128
    %744 = vxpose.xlu0.c.b16.cont [4/8] 0, 128
    %745 = vxpose.xlu0.c.b16.cont [5/8] 0, 128
    %746 = vxpose.xlu0.c.b16.cont [6/8] 0, 128
    %747 = vxpose.xlu0.c.b16.cont [7/8] 0, 128
    %748 = vxpose.xlu0.c.b16.end [8/8] 0, 128
    %v749 = vpop.trf.xlu0
    %v750 = vpop.trf.xlu0
    %v751 = vpop.trf.xlu0
    %v752 = vpop.trf.xlu0
    %v753 = vpop.trf.xlu0
    %v754 = vpop.trf.xlu0
    %v755 = vpop.trf.xlu0
    %v756 = vpop.trf.xlu0
    %758 = vrot.lane.b32.xlu0 %v736, 112
    %v759 = vpop.permute.xlu0 %758
    %v761 = vsel %vm279, %v749, 0
    %v764 = vsel %vm431, %v759, 0
    %766 = vmatprep.subr.bf16.mxu0 0
    %767 = vmatpush1.bf16.msra.mxu0 0
    %768 = vmatprep.subr.bf16.mxu0 0
    %769 = vmatpush1.bf16.msra.mxu0 0
    %770 = vmatprep.subr.bf16.mxu0 0
    %771 = vmatpush1.bf16.msra.mxu0 0
    %772 = vmatprep.subr.bf16.mxu0 0
    %773 = vmatpush1.bf16.msra.mxu0 0
    %774 = vmatprep.subr.bf16.mxu0 0
    %775 = vmatpush1.bf16.msra.mxu0 0
    %776 = vmatprep.subr.bf16.mxu0 0
    %777 = vmatpush1.bf16.msra.mxu0 0
    %778 = vmatprep.subr.bf16.mxu0 0
    %779 = vmatpush1.bf16.msra.mxu0 0
    %780 = vmatprep.subr.bf16.mxu0 0
    %781 = vmatpush1.bf16.msra.mxu0 %v764
    %782 = vmatprep.subr.bf16.mxu0 0
    %783 = vmatpush2.bf16.msra.mxu0 0
    %784 = vmatprep.subr.bf16.mxu0 0
    %785 = vmatpush2.bf16.msra.mxu0 0
    %786 = vmatprep.subr.bf16.mxu0 0
    %787 = vmatpush2.bf16.msra.mxu0 0
    %788 = vmatprep.subr.bf16.mxu0 0
    %789 = vmatpush2.bf16.msra.mxu0 0
    %790 = vmatprep.subr.bf16.mxu0 0
    %791 = vmatpush2.bf16.msra.mxu0 0
    %792 = vmatprep.subr.bf16.mxu0 0
    %793 = vmatpush2.bf16.msra.mxu0 0
    %794 = vmatprep.subr.bf16.mxu0 0
    %795 = vmatpush2.bf16.msra.mxu0 0
    %796 = vmatprep.subr.bf16.mxu0 0
    %797 = vmatpush2.bf16.msra.mxu0 0
    %798 = vmatprep.mubr.bf16.mxu0 0
    %799 = vmatmul.mubr.bf16.gmra.mxu0 %v761
    %v800 = vpop.f32.mrf.mxu0
    %v801 = vadd.f32 0.0, %v800
    %v802 = vpop.f32.mrf.mxu0
    %v803 = vpop.f32.mrf.mxu0
    %v804 = vadd.f32 0.0, %v803
    %v805 = vpop.f32.mrf.mxu0
    %806 = vdwg.mxu0
    %807 = vrot.lane.b32.xlu0 %v318, 96
    %v808 = vpop.permute.xlu0 %807
    %810 = vxpose.xlu0.c.b16.start [1/8] %v808, 128
    %811 = vxpose.xlu0.c.b16.cont [2/8] 0, 128
    %812 = vxpose.xlu0.c.b16.cont [3/8] 0, 128
    %813 = vxpose.xlu0.c.b16.cont [4/8] 0, 128
    %814 = vxpose.xlu0.c.b16.cont [5/8] 0, 128
    %815 = vxpose.xlu0.c.b16.cont [6/8] 0, 128
    %816 = vxpose.xlu0.c.b16.cont [7/8] 0, 128
    %817 = vxpose.xlu0.c.b16.end [8/8] 0, 128
    %v818 = vpop.trf.xlu0
    %v819 = vpop.trf.xlu0
    %v820 = vpop.trf.xlu0
    %v821 = vpop.trf.xlu0
    %v822 = vpop.trf.xlu0
    %v823 = vpop.trf.xlu0
    %v824 = vpop.trf.xlu0
    %v825 = vpop.trf.xlu0
    %827 = vrot.lane.b32.xlu0 %v737, 112
    %v828 = vpop.permute.xlu0 %827
    %v830 = vsel %vm279, %v818, 0
    %v833 = vsel %vm431, %v828, 0
    %835 = vmatprep.subr.bf16.mxu0 0
    %836 = vmatpush1.bf16.msra.mxu0 0
    %837 = vmatprep.subr.bf16.mxu0 0
    %838 = vmatpush1.bf16.msra.mxu0 0
    %839 = vmatprep.subr.bf16.mxu0 0
    %840 = vmatpush1.bf16.msra.mxu0 0
    %841 = vmatprep.subr.bf16.mxu0 0
    %842 = vmatpush1.bf16.msra.mxu0 0
    %843 = vmatprep.subr.bf16.mxu0 0
    %844 = vmatpush1.bf16.msra.mxu0 0
    %845 = vmatprep.subr.bf16.mxu0 0
    %846 = vmatpush1.bf16.msra.mxu0 0
    %847 = vmatprep.subr.bf16.mxu0 0
    %848 = vmatpush1.bf16.msra.mxu0 0
    %849 = vmatprep.subr.bf16.mxu0 0
    %850 = vmatpush1.bf16.msra.mxu0 %v833
    %851 = vmatprep.subr.bf16.mxu0 0
    %852 = vmatpush2.bf16.msra.mxu0 0
    %853 = vmatprep.subr.bf16.mxu0 0
    %854 = vmatpush2.bf16.msra.mxu0 0
    %855 = vmatprep.subr.bf16.mxu0 0
    %856 = vmatpush2.bf16.msra.mxu0 0
    %857 = vmatprep.subr.bf16.mxu0 0
    %858 = vmatpush2.bf16.msra.mxu0 0
    %859 = vmatprep.subr.bf16.mxu0 0
    %860 = vmatpush2.bf16.msra.mxu0 0
    %861 = vmatprep.subr.bf16.mxu0 0
    %862 = vmatpush2.bf16.msra.mxu0 0
    %863 = vmatprep.subr.bf16.mxu0 0
    %864 = vmatpush2.bf16.msra.mxu0 0
    %865 = vmatprep.subr.bf16.mxu0 0
    %866 = vmatpush2.bf16.msra.mxu0 0
    %867 = vmatprep.mubr.bf16.mxu0 0
    %868 = vmatmul.mubr.bf16.gmra.mxu0 %v830
    %v869 = vpop.f32.mrf.mxu0
    %v870 = vadd.f32 0.0, %v869
    %v871 = vpop.f32.mrf.mxu0
    %v872 = vpop.f32.mrf.mxu0
    %v873 = vadd.f32 0.0, %v872
    %v874 = vpop.f32.mrf.mxu0
    %875 = vdwg.mxu0
    %v876 = vadd.f32 %v602, %v801
    %v877 = vadd.f32 %v605, %v804
    %v878 = vadd.f32 %v665, %v870
    %v879 = vadd.f32 %v668, %v873
    %vm880 = vcmask 261312
    %v881 = vsel %vm880, %v273, -inf
    %882 = vmax.xlane.f32.xlu0 %v881
    %v883 = vpop.xlane.xlu0 %882
    %v884 = vsel %vm880, %v276, -inf
    %885 = vmax.xlane.f32.xlu0 %v884
    %v886 = vpop.xlane.xlu0 %885
    %v887 = vsub.f32 %v273, %v883
    %v888 = vsub.f32 %v276, %v886
    %v889 = vmul.f32 %v887, 1.442695
    %v890 = vpow.pop %v889
    %v891 = vmul.f32 %v888, 1.442695
    %v892 = vpow.pop %v891
    %895 = vrot.lane.b32.xlu0 %v890, 104
    %v896 = vpop.permute.xlu0 %895
    %897 = vrot.lane.b32.xlu0 %v892, 104
    %v898 = vpop.permute.xlu0 %897
    %v901 = vsel %vm279, %v896, 0.0
    %902 = vadd.xlane.f32.xlu0 %v901
    %v903 = vpop.xlane.xlu0 %902
    %v904 = vsel %vm279, %v898, 0.0
    %905 = vadd.xlane.f32.xlu0 %v904
    %v906 = vpop.xlane.xlu0 %905
    %v907 = vrcp.pop %v903
    %v908 = vrcp.pop %v906
    %v909 = vmul.f32 %v890, %v907
    %v910 = vmul.f32 %v892, %v908
    %911 = vset.pattern.permute.xlu0 3
    %912 = vperm.xlu0 %911, %v203
    %v913 = vpop.permute.xlu0 %912
    %915 = vset.pattern.permute.xlu0 3
    %916 = vperm.xlu0 %915, %v205
    %v917 = vpop.permute.xlu0 %916
    %v919 = vmul.f32 %v909, %v913
    %v920 = vmul.f32 %v910, %v917
    %v921 = vsel %vm880, %v919, 0.0
    %v922 = vrot.slane %v921, 4
    %v923 = vadd.f32 %v921, %v922
    %v924 = vrot.slane %v923, 2
    %v925 = vadd.f32 %v923, %v924
    %v926 = vrot.slane %v925, 1
    %v927 = vadd.f32 %v925, %v926
    %v928 = vsel %vm880, %v920, 0.0
    %v929 = vrot.slane %v928, 4
    %v930 = vadd.f32 %v928, %v929
    %v931 = vrot.slane %v930, 2
    %v932 = vadd.f32 %v930, %v931
    %v933 = vrot.slane %v932, 1
    %v934 = vadd.f32 %v932, %v933
    %937 = vrot.lane.b32.xlu0 %v927, 104
    %v938 = vpop.permute.xlu0 %937
    %939 = vrot.lane.b32.xlu0 %v934, 104
    %v940 = vpop.permute.xlu0 %939
    %v943 = vadd.f32 %v734, %v938
    %v944 = vadd.f32 %v735, %v940
    %v945 = vpack.c.bf16 %v919, %v919
    %v946 = vpack.c.bf16 %v920, %v920
    %947 = vrot.lane.b32.xlu0 %v317, 80
    %v948 = vpop.permute.xlu0 %947
    %950 = vxpose.xlu0.c.b16.start [1/8] %v948, 128
    %951 = vxpose.xlu0.c.b16.cont [2/8] 0, 128
    %952 = vxpose.xlu0.c.b16.cont [3/8] 0, 128
    %953 = vxpose.xlu0.c.b16.cont [4/8] 0, 128
    %954 = vxpose.xlu0.c.b16.cont [5/8] 0, 128
    %955 = vxpose.xlu0.c.b16.cont [6/8] 0, 128
    %956 = vxpose.xlu0.c.b16.cont [7/8] 0, 128
    %957 = vxpose.xlu0.c.b16.end [8/8] 0, 128
    %v958 = vpop.trf.xlu0
    %v959 = vpop.trf.xlu0
    %v960 = vpop.trf.xlu0
    %v961 = vpop.trf.xlu0
    %v962 = vpop.trf.xlu0
    %v963 = vpop.trf.xlu0
    %v964 = vpop.trf.xlu0
    %v965 = vpop.trf.xlu0
    %967 = vrot.lane.b32.xlu0 %v945, 104
    %v968 = vpop.permute.xlu0 %967
    %v970 = vsel %vm279, %v958, 0
    %v973 = vsel %vm431, %v968, 0
    %975 = vmatprep.subr.bf16.mxu0 0
    %976 = vmatpush1.bf16.msra.mxu0 0
    %977 = vmatprep.subr.bf16.mxu0 0
    %978 = vmatpush1.bf16.msra.mxu0 0
    %979 = vmatprep.subr.bf16.mxu0 0
    %980 = vmatpush1.bf16.msra.mxu0 0
    %981 = vmatprep.subr.bf16.mxu0 0
    %982 = vmatpush1.bf16.msra.mxu0 0
    %983 = vmatprep.subr.bf16.mxu0 0
    %984 = vmatpush1.bf16.msra.mxu0 0
    %985 = vmatprep.subr.bf16.mxu0 0
    %986 = vmatpush1.bf16.msra.mxu0 0
    %987 = vmatprep.subr.bf16.mxu0 0
    %988 = vmatpush1.bf16.msra.mxu0 0
    %989 = vmatprep.subr.bf16.mxu0 0
    %990 = vmatpush1.bf16.msra.mxu0 %v973
    %991 = vmatprep.subr.bf16.mxu0 0
    %992 = vmatpush2.bf16.msra.mxu0 0
    %993 = vmatprep.subr.bf16.mxu0 0
    %994 = vmatpush2.bf16.msra.mxu0 0
    %995 = vmatprep.subr.bf16.mxu0 0
    %996 = vmatpush2.bf16.msra.mxu0 0
    %997 = vmatprep.subr.bf16.mxu0 0
    %998 = vmatpush2.bf16.msra.mxu0 0
    %999 = vmatprep.subr.bf16.mxu0 0
    %1000 = vmatpush2.bf16.msra.mxu0 0
    %1001 = vmatprep.subr.bf16.mxu0 0
    %1002 = vmatpush2.bf16.msra.mxu0 0
    %1003 = vmatprep.subr.bf16.mxu0 0
    %1004 = vmatpush2.bf16.msra.mxu0 0
    %1005 = vmatprep.subr.bf16.mxu0 0
    %1006 = vmatpush2.bf16.msra.mxu0 0
    %1007 = vmatprep.mubr.bf16.mxu0 0
    %1008 = vmatmul.mubr.bf16.gmra.mxu0 %v970
    %v1009 = vpop.f32.mrf.mxu0
    %v1010 = vadd.f32 0.0, %v1009
    %v1011 = vpop.f32.mrf.mxu0
    %v1012 = vpop.f32.mrf.mxu0
    %v1013 = vadd.f32 0.0, %v1012
    %v1014 = vpop.f32.mrf.mxu0
    %1015 = vdwg.mxu0
    %1016 = vrot.lane.b32.xlu0 %v318, 80
    %v1017 = vpop.permute.xlu0 %1016
    %1019 = vxpose.xlu0.c.b16.start [1/8] %v1017, 128
    %1020 = vxpose.xlu0.c.b16.cont [2/8] 0, 128
    %1021 = vxpose.xlu0.c.b16.cont [3/8] 0, 128
    %1022 = vxpose.xlu0.c.b16.cont [4/8] 0, 128
    %1023 = vxpose.xlu0.c.b16.cont [5/8] 0, 128
    %1024 = vxpose.xlu0.c.b16.cont [6/8] 0, 128
    %1025 = vxpose.xlu0.c.b16.cont [7/8] 0, 128
    %1026 = vxpose.xlu0.c.b16.end [8/8] 0, 128
    %v1027 = vpop.trf.xlu0
    %v1028 = vpop.trf.xlu0
    %v1029 = vpop.trf.xlu0
    %v1030 = vpop.trf.xlu0
    %v1031 = vpop.trf.xlu0
    %v1032 = vpop.trf.xlu0
    %v1033 = vpop.trf.xlu0
    %v1034 = vpop.trf.xlu0
    %1036 = vrot.lane.b32.xlu0 %v946, 104
    %v1037 = vpop.permute.xlu0 %1036
    %v1039 = vsel %vm279, %v1027, 0
    %v1042 = vsel %vm431, %v1037, 0
    %1044 = vmatprep.subr.bf16.mxu0 0
    %1045 = vmatpush1.bf16.msra.mxu0 0
    %1046 = vmatprep.subr.bf16.mxu0 0
    %1047 = vmatpush1.bf16.msra.mxu0 0
    %1048 = vmatprep.subr.bf16.mxu0 0
    %1049 = vmatpush1.bf16.msra.mxu0 0
    %1050 = vmatprep.subr.bf16.mxu0 0
    %1051 = vmatpush1.bf16.msra.mxu0 0
    %1052 = vmatprep.subr.bf16.mxu0 0
    %1053 = vmatpush1.bf16.msra.mxu0 0
    %1054 = vmatprep.subr.bf16.mxu0 0
    %1055 = vmatpush1.bf16.msra.mxu0 0
    %1056 = vmatprep.subr.bf16.mxu0 0
    %1057 = vmatpush1.bf16.msra.mxu0 0
    %1058 = vmatprep.subr.bf16.mxu0 0
    %1059 = vmatpush1.bf16.msra.mxu0 %v1042
    %1060 = vmatprep.subr.bf16.mxu0 0
    %1061 = vmatpush2.bf16.msra.mxu0 0
    %1062 = vmatprep.subr.bf16.mxu0 0
    %1063 = vmatpush2.bf16.msra.mxu0 0
    %1064 = vmatprep.subr.bf16.mxu0 0
    %1065 = vmatpush2.bf16.msra.mxu0 0
    %1066 = vmatprep.subr.bf16.mxu0 0
    %1067 = vmatpush2.bf16.msra.mxu0 0
    %1068 = vmatprep.subr.bf16.mxu0 0
    %1069 = vmatpush2.bf16.msra.mxu0 0
    %1070 = vmatprep.subr.bf16.mxu0 0
    %1071 = vmatpush2.bf16.msra.mxu0 0
    %1072 = vmatprep.subr.bf16.mxu0 0
    %1073 = vmatpush2.bf16.msra.mxu0 0
    %1074 = vmatprep.subr.bf16.mxu0 0
    %1075 = vmatpush2.bf16.msra.mxu0 0
    %1076 = vmatprep.mubr.bf16.mxu0 0
    %1077 = vmatmul.mubr.bf16.gmra.mxu0 %v1039
    %v1078 = vpop.f32.mrf.mxu0
    %v1079 = vadd.f32 0.0, %v1078
    %v1080 = vpop.f32.mrf.mxu0
    %v1081 = vpop.f32.mrf.mxu0
    %v1082 = vadd.f32 0.0, %v1081
    %v1083 = vpop.f32.mrf.mxu0
    %1084 = vdwg.mxu0
    %v1085 = vadd.f32 %v876, %v1010
    %v1086 = vadd.f32 %v877, %v1013
    %v1087 = vadd.f32 %v878, %v1079
    %v1088 = vadd.f32 %v879, %v1082
    %v1089 = vld [vmem:[%s6] sm:$0xff]
    %v1090 = vld [vmem:[%s6 + $0x8] sm:$0xff]
    %v1091 = vlaneseq
    %v1092 = vshrl.u32 %v1091, 7
    %v1093 = vsub.s32 0, %v1092
    %v1094 = vrot.slane %v943, %v1093
    %v1095 = vlaneseq
    %v1096 = vshrl.u32 %v1095, 7
    %v1097 = vsub.s32 0, %v1096
    %v1098 = vrot.slane %v944, %v1097
    %v1099 = vmul.f32 %v1094, %v1089
    %v1100 = vmul.f32 %v1094, %v1090
    %v1101 = vmul.f32 %v1098, %v1089
    %v1102 = vmul.f32 %v1098, %v1090
    %v1103 = vsub.f32 %v1085, %v1099
    %v1104 = vsub.f32 %v1086, %v1100
    %v1105 = vsub.f32 %v1087, %v1101
    %v1106 = vsub.f32 %v1088, %v1102
    %v1107 = vmul.f32 %v1103, %v1103
    %v1108 = vmul.f32 %v1104, %v1104
    %v1109 = vmul.f32 %v1105, %v1105
    %v1110 = vmul.f32 %v1106, %v1106
    %v1111 = vsel %vm279, %v1107, 0.0
    %v1112 = vsel %vm279, %v1108, 0.0
    %v1113 = vadd.f32 %v1111, %v1112
    %v1114 = vrot.slane %v1113, 4
    %v1115 = vadd.f32 %v1113, %v1114
    %v1116 = vrot.slane %v1115, 2
    %v1117 = vadd.f32 %v1115, %v1116
    %v1118 = vrot.slane %v1117, 1
    %v1119 = vadd.f32 %v1117, %v1118
    %v1120 = vsel %vm279, %v1109, 0.0
    %v1121 = vsel %vm279, %v1110, 0.0
    %v1122 = vadd.f32 %v1120, %v1121
    %v1123 = vrot.slane %v1122, 4
    %v1124 = vadd.f32 %v1122, %v1123
    %v1125 = vrot.slane %v1124, 2
    %v1126 = vadd.f32 %v1124, %v1125
    %v1127 = vrot.slane %v1126, 1
    %v1128 = vadd.f32 %v1126, %v1127
    %v1129 = vmax.f32 %v1119, 1e-24
    %v1130 = vmax.f32 %v1128, 1e-24
    %v1131 = vrsqrt.pop %v1129
    %v1132 = vrsqrt.pop %v1130
    %v1133 = vmul.f32 %v1103, %v1131
    %v1134 = vmul.f32 %v1104, %v1131
    %v1135 = vmul.f32 %v1105, %v1132
    %v1136 = vmul.f32 %v1106, %v1132
    %v1139 = vrot.slane %v1135, 7
    %vm1140 = vcmask 1041409
    %v1141 = vsel %vm1140, %v1139, %v1133
    %vm1143 = vcmask 58368
    %1144 = vst.msk [vmem:[#allocation2] sm:$0x3] %vm1143, %v1141
    %vm1145 = vcmask 1042434
    %v1146 = vsel %vm1145, %v1139, %v1133
    %1147 = vrot.lane.b32.xlu0 %v1146, 8
    %v1148 = vpop.permute.xlu0 %1147
    %vm1150 = vcmask 124993
    %1151 = vst.msk [vmem:[#allocation2 - $0x1] sm:$0x6] %vm1150, %v1148
    %vm1152 = vcmask 1043459
    %v1153 = vsel %vm1152, %v1139, %v1133
    %1154 = vrot.lane.b32.xlu0 %v1153, 16
    %v1155 = vpop.permute.xlu0 %1154
    %vm1157 = vcmask 191618
    %1158 = vst.msk [vmem:[#allocation2 - $0x2] sm:$0xc] %vm1157, %v1155
    %vm1159 = vcmask 1044484
    %v1160 = vsel %vm1159, %v1139, %v1133
    %1161 = vrot.lane.b32.xlu0 %v1160, 24
    %v1162 = vpop.permute.xlu0 %1161
    %vm1164 = vcmask 258243
    %1165 = vst.msk [vmem:[#allocation2 - $0x3] sm:$0x18] %vm1164, %v1162
    %vm1166 = vcmask 1045509
    %v1167 = vsel %vm1166, %v1139, %v1133
    %1168 = vrot.lane.b32.xlu0 %v1167, 32
    %v1169 = vpop.permute.xlu0 %1168
    %vm1171 = vcmask 324868
    %1172 = vst.msk [vmem:[#allocation2 - $0x4] sm:$0x30] %vm1171, %v1169
    %vm1173 = vcmask 1046534
    %v1174 = vsel %vm1173, %v1139, %v1133
    %1175 = vrot.lane.b32.xlu0 %v1174, 40
    %v1176 = vpop.permute.xlu0 %1175
    %vm1178 = vcmask 391493
    %1179 = vst.msk [vmem:[#allocation2 - $0x5] sm:$0x60] %vm1178, %v1176
    %vm1180 = vcmask 1047559
    %v1181 = vsel %vm1180, %v1139, %v1133
    %1182 = vrot.lane.b32.xlu0 %v1181, 48
    %v1183 = vpop.permute.xlu0 %1182
    %vm1185 = vcmask 458118
    %1186 = vst.msk [vmem:[#allocation2 - $0x6] sm:$0xc0] %vm1185, %v1183
    %1187 = vrot.lane.b32.xlu0 %v1133, 56
    %v1188 = vpop.permute.xlu0 %1187
    %1189 = vrot.lane.b32.xlu0 %v1139, 56
    %v1190 = vpop.permute.xlu0 %1189
    %vm1193 = vcmask 523719
    %1194 = vst.msk [vmem:[#allocation2 - $0x7] sm:$0x80] %vm1193, %v1188
    %vm1195 = vcmask 516544
    %1196 = vst.msk [vmem:[#allocation2 + $0x1] sm:$0x1] %vm1195, %v1190
    %v1199 = vrot.slane %v1136, 7
    %v1200 = vsel %vm1140, %v1199, %v1134
    %1201 = vrot.lane.b32.xlu0 %v1200, 64
    %v1202 = vpop.permute.xlu0 %1201
    %vm1204 = vcmask 583168
    %1205 = vst.msk [vmem:[#allocation2] sm:$0x3] %vm1204, %v1202
    %v1206 = vsel %vm1145, %v1199, %v1134
    %1207 = vrot.lane.b32.xlu0 %v1206, 72
    %v1208 = vpop.permute.xlu0 %1207
    %vm1210 = vcmask 649793
    %1211 = vst.msk [vmem:[#allocation2 - $0x1] sm:$0x6] %vm1210, %v1208
    %v1212 = vsel %vm1152, %v1199, %v1134
    %1213 = vrot.lane.b32.xlu0 %v1212, 80
    %v1214 = vpop.permute.xlu0 %1213
    %vm1216 = vcmask 716418
    %1217 = vst.msk [vmem:[#allocation2 - $0x2] sm:$0xc] %vm1216, %v1214
    %v1218 = vsel %vm1159, %v1199, %v1134
    %1219 = vrot.lane.b32.xlu0 %v1218, 88
    %v1220 = vpop.permute.xlu0 %1219
    %vm1222 = vcmask 783043
    %1223 = vst.msk [vmem:[#allocation2 - $0x3] sm:$0x18] %vm1222, %v1220
    %v1224 = vsel %vm1166, %v1199, %v1134
    %1225 = vrot.lane.b32.xlu0 %v1224, 96
    %v1226 = vpop.permute.xlu0 %1225
    %vm1228 = vcmask 849668
    %1229 = vst.msk [vmem:[#allocation2 - $0x4] sm:$0x30] %vm1228, %v1226
    %v1230 = vsel %vm1173, %v1199, %v1134
    %1231 = vrot.lane.b32.xlu0 %v1230, 104
    %v1232 = vpop.permute.xlu0 %1231
    %vm1234 = vcmask 916293
    %1235 = vst.msk [vmem:[#allocation2 - $0x5] sm:$0x60] %vm1234, %v1232
    %v1236 = vsel %vm1180, %v1199, %v1134
    %1237 = vrot.lane.b32.xlu0 %v1236, 112
    %v1238 = vpop.permute.xlu0 %1237
    %vm1240 = vcmask 982918
    %1241 = vst.msk [vmem:[#allocation2 - $0x6] sm:$0xc0] %vm1240, %v1238
    %1242 = vrot.lane.b32.xlu0 %v1134, 120
    %v1243 = vpop.permute.xlu0 %1242
    %1244 = vrot.lane.b32.xlu0 %v1199, 120
    %v1245 = vpop.permute.xlu0 %1244
    %vm1248 = vcmask 1048519
    %1249 = vst.msk [vmem:[#allocation2 - $0x7] sm:$0x80] %vm1248, %v1243
    %vm1250 = vcmask 1041344
    %1251 = vst.msk [vmem:[#allocation2 + $0x1] sm:$0x1] %vm1250, %v1245
    %v1252 = vld [vmem:[#allocation2] sm:$0x3]
    %v1253 = vpack.c.bf16 %v1252, %v1252
    %v1254 = vld [vmem:[%s7] sm:$0xf]
    %v1255 = vld [vmem:[%s7 + $0x4] sm:$0xf]
    %v1256 = vld [vmem:[%s7 + $0x8] sm:$0xf]
    %v1257 = vld [vmem:[%s7 + $0xc] sm:$0xf]
    %v1258 = vld [vmem:[%s7 + $0x10] sm:$0xf]
    %v1259 = vld [vmem:[%s7 + $0x14] sm:$0xf]
    %v1260 = vld [vmem:[%s7 + $0x18] sm:$0xf]
    %v1261 = vld [vmem:[%s7 + $0x1c] sm:$0xf]
    %v1262 = vld [vmem:[%s7 + $0x20] sm:$0xf]
    %v1263 = vld [vmem:[%s7 + $0x24] sm:$0xf]
    %v1264 = vld [vmem:[%s7 + $0x28] sm:$0xf]
    %v1265 = vld [vmem:[%s7 + $0x2c] sm:$0xf]
    %v1266 = vld [vmem:[%s7 + $0x30] sm:$0xf]
    %v1267 = vld [vmem:[%s7 + $0x34] sm:$0xf]
    %v1268 = vld [vmem:[%s7 + $0x38] sm:$0xf]
    %v1269 = vld [vmem:[%s7 + $0x3c] sm:$0xf]
    %v1270 = vld [vmem:[%s8] sm:$0x1]
    %v1272 = vlaneseq
    %v1273 = vshrl.u32 %v1272, 7
    %v1274 = vsub.s32 0, %v1273
    %v1275 = vrot.slane %v1270, %v1274
    %v1293 = vunpack.c.l.b16 %v1254
    %v1294 = vunpack.c.l.b16 %v1255
    %v1295 = vunpack.c.l.b16 %v1256
    %v1296 = vunpack.c.l.b16 %v1257
    %v1297 = vunpack.c.l.b16 %v1258
    %v1298 = vunpack.c.l.b16 %v1259
    %v1299 = vunpack.c.l.b16 %v1260
    %v1300 = vunpack.c.l.b16 %v1261
    %v1301 = vunpack.c.l.b16 %v1262
    %v1302 = vunpack.c.l.b16 %v1263
    %v1303 = vunpack.c.l.b16 %v1264
    %v1304 = vunpack.c.l.b16 %v1265
    %v1305 = vunpack.c.l.b16 %v1266
    %v1306 = vunpack.c.l.b16 %v1267
    %v1307 = vunpack.c.l.b16 %v1268
    %v1308 = vunpack.c.l.b16 %v1269
    %v1309 = vpack.c.b16 %v1294, %v1293
    %v1310 = vpack.c.b16 %v1296, %v1295
    %v1311 = vpack.c.b16 %v1298, %v1297
    %v1312 = vpack.c.b16 %v1300, %v1299
    %v1313 = vpack.c.b16 %v1302, %v1301
    %v1314 = vpack.c.b16 %v1304, %v1303
    %v1315 = vpack.c.b16 %v1306, %v1305
    %v1316 = vpack.c.b16 %v1308, %v1307
    %1325 = vmatprep.subr.bf16.mxu0 0
    %1326 = vmatpush1.bf16.msra.mxu0 %v1316
    %1327 = vmatprep.subr.bf16.mxu0 0
    %1328 = vmatpush1.bf16.msra.mxu0 %v1315
    %1329 = vmatprep.subr.bf16.mxu0 0
    %1330 = vmatpush1.bf16.msra.mxu0 %v1314
    %1331 = vmatprep.subr.bf16.mxu0 0
    %1332 = vmatpush1.bf16.msra.mxu0 %v1313
    %1333 = vmatprep.subr.bf16.mxu0 0
    %1334 = vmatpush1.bf16.msra.mxu0 %v1312
    %1335 = vmatprep.subr.bf16.mxu0 0
    %1336 = vmatpush1.bf16.msra.mxu0 %v1311
    %1337 = vmatprep.subr.bf16.mxu0 0
    %1338 = vmatpush1.bf16.msra.mxu0 %v1310
    %1339 = vmatprep.subr.bf16.mxu0 0
    %1340 = vmatpush1.bf16.msra.mxu0 %v1309
    %1341 = vmatprep.subr.bf16.mxu0 0
    %1342 = vmatpush2.bf16.msra.mxu0 0
    %1343 = vmatprep.subr.bf16.mxu0 0
    %1344 = vmatpush2.bf16.msra.mxu0 0
    %1345 = vmatprep.subr.bf16.mxu0 0
    %1346 = vmatpush2.bf16.msra.mxu0 0
    %1347 = vmatprep.subr.bf16.mxu0 0
    %1348 = vmatpush2.bf16.msra.mxu0 0
    %1349 = vmatprep.subr.bf16.mxu0 0
    %1350 = vmatpush2.bf16.msra.mxu0 0
    %1351 = vmatprep.subr.bf16.mxu0 0
    %1352 = vmatpush2.bf16.msra.mxu0 0
    %1353 = vmatprep.subr.bf16.mxu0 0
    %1354 = vmatpush2.bf16.msra.mxu0 0
    %1355 = vmatprep.subr.bf16.mxu0 0
    %1356 = vmatpush2.bf16.msra.mxu0 0
    %1357 = vmatprep.mubr.bf16.mxu0 0
    %1358 = vmatmul.mubr.bf16.gmra.mxu0 %v1253
    %v1359 = vpop.f32.mrf.mxu0
    %v1360 = vadd.f32 %v1275, %v1359
    %v1361 = vpop.f32.mrf.mxu0
    %v1362 = vpop.f32.mrf.mxu0
    %v1363 = vpop.f32.mrf.mxu0
    %1364 = vdwg.mxu0
    %1365 = vst [vmem:[#allocation3] sm:$0x3] %v1360
    // Predicated region
    $region38: #{tpu_custom_call.1} parent=1 // pred_check
      _
    $region39: #{tpu_custom_call.1} parent=1 // pred_check_branch
      %1367 = sbr.rel (0) target = $region41
    $region40: #{tpu_custom_call.1} parent=1 // pred_region
      %s1369 = ssub.s32 32, 32
      %1370 = vsyncadd [#allocation4], %s1369
      %s1372 = sshll.u32 [#allocation3], 4
      %s1373 = int_to_ptr.vmem [resolvable:$true] %s1372
      %1375 = dma.vmem_to_hbm [thread:$0]  %s1373, 32, %s9, [#allocation4]
    $region41: #{tpu_custom_call.1} parent=1 // pred_fallthru
      _
    // Predicated region
    $region42: #{tpu_custom_call.1} parent=1 // pred_check
      _
    $region43: #{tpu_custom_call.1} parent=1 // pred_check_branch
      %1377 = sbr.rel (0) target = $region45
    $region44: #{tpu_custom_call.1} parent=1 // pred_region
      %1378 = dma.done [#allocation4], 32
    $region45: #{tpu_custom_call.1} parent=1 // pred_fallthru
      _
    %1379 = vsyncpa [#allocation4], 1

</llo_original>
